<compile_context>
chip_gen: v7x
topology: tpu7x:2x2x1
jax: 0.10.0
libtpu: 0.0.40
codegen_flags: <defaults>
</compile_context>

<pallas_src>
import jax
import jax.numpy as jnp
from jax.experimental import pallas as pl
from jax.experimental.pallas import tpu as pltpu


# ----------------------------------------------------------------------------
# Fused two-head kernel: one grid step = TB batch rows, both critic heads.
# All intermediates are (TB, feature) — purely row-wise, no cross-row work.
# ----------------------------------------------------------------------------
def double_critic_kernel(s_ref, w_ref, act_ref,
                         w1_ref, b1_ref, w2_ref, b2_ref,
                         w3_ref, ww_ref, b3_ref,
                         wfc1_ref, bfc1_ref,
                         wx_ref, wta_ref, bfc2_ref,
                         out_ref):
    f32 = jnp.float32

    # conv1 (1x3, both heads): block-diag-over-assets Toeplitz matmul + bias + ReLU
    x1 = jnp.dot(s_ref[...], w1_ref[...], preferred_element_type=f32) + b1_ref[...]
    x1 = jnp.maximum(x1, 0.0)                                   # (TB, A*4*Wo)

    # conv2 (1 x (W-2), both heads): block-diag over assets and heads
    x2 = jnp.dot(x1, w2_ref[...], preferred_element_type=f32) + b2_ref[...]
    x2 = jnp.maximum(x2, 0.0)                                   # (TB, A*40)

    # conv3 (1x1): channel matmul + portfolio-weight channel folded in as a tiny matmul
    # on the raw `w` input (row 0 of Ww is zero, so the cash column is ignored) + bias.
    x3 = (jnp.dot(x2, w3_ref[...], preferred_element_type=f32)
          + jnp.dot(w_ref[...], ww_ref[...], preferred_element_type=f32)
          + b3_ref[...])
    x3 = jnp.maximum(x3, 0.0)                                   # (TB, 2*A)

    # fc1 on the action, both heads side by side
    a1 = jnp.dot(act_ref[...], wfc1_ref[...], preferred_element_type=f32) + bfc1_ref[...]
    a1 = jnp.maximum(a1, 0.0)                                   # (TB, 2*N)

    # fc2: conv-path + action-path (cash slot contributes relu(0)*w == 0 and is elided)
    out_ref[...] = (jnp.dot(x3, wx_ref[...], preferred_element_type=f32)
                    + jnp.dot(a1, wta_ref[...], preferred_element_type=f32)
                    + bfc2_ref[...])                            # (TB, 2)


# ----------------------------------------------------------------------------
# Parameter init (deterministic, PyTorch-like uniform fan-in init)
# ----------------------------------------------------------------------------
def make_critic_params(key, in_channels, num_assets, window_length):
    C, N, W = in_channels, num_assets, window_length
    Wo = W - 2
    ks = jax.random.split(key, 10)

    def u(k, shape, fan_in):
        bound = 1.0 / jnp.sqrt(jnp.float32(fan_in))
        return jax.random.uniform(k, shape, jnp.float32, -bound, bound)

    return dict(
        conv1_w=u(ks[0], (2, C, 1, 3), C * 3),
        conv1_b=u(ks[1], (2,), C * 3),
        conv2_w=u(ks[2], (20, 2, 1, Wo), 2 * Wo),
        conv2_b=u(ks[3], (20,), 2 * Wo),
        conv3_w=u(ks[4], (1, 21, 1, 1), 21),
        conv3_b=u(ks[5], (1,), 21),
        fc1_w=u(ks[6], (N, N), N),
        fc1_b=u(ks[7], (N,), N),
        fc2_w=u(ks[8], (1, 2 * N), 2 * N),
        fc2_b=u(ks[9], (1,), 2 * N),
    )


# ----------------------------------------------------------------------------
# Weight fusion, hoisted out of the forward (run once per parameter update).
# Column conventions:
#   conv1 out col = a*(4*Wo) + j*4 + k          (k = 2*head + out_channel)
#   conv2 out col = a*40 + 20*head + m
#   conv3 out col = a*2  + head
#   fc1   out col = head*N + i
# ----------------------------------------------------------------------------
def fuse_double_critic_params(p1, p2, in_channels, num_assets, window_length):
    f32 = jnp.float32
    C, N, W = in_channels, num_assets, window_length
    A, Wo = N - 1, W - 2

    # conv1: per-asset Toeplitz block (C*W, 4*Wo), block-diagonal over assets
    k1 = jnp.concatenate([p1['conv1_w'], p2['conv1_w']], axis=0).astype(f32)   # (4,C,1,3)
    k1t = jnp.transpose(k1[:, :, 0, :], (1, 2, 0))                             # (C,3,4)
    T = jnp.zeros((C, W, Wo, 4), f32)
    for j in range(Wo):
        T = T.at[:, j:j + 3, j, :].set(k1t)
    T = T.reshape(C, W, Wo * 4)
    W1 = jnp.zeros((C, A, W, A, Wo * 4), f32)
    for a in range(A):
        W1 = W1.at[:, a, :, a, :].set(T)
    W1 = W1.reshape(C * A * W, A * Wo * 4)
    b1c = jnp.concatenate([p1['conv1_b'], p2['conv1_b']]).astype(f32)          # (4,)
    b1 = jnp.tile(b1c, (A * Wo,)).reshape(1, A * Wo * 4)

    # conv2: per-asset block (4*Wo, 40), block-diagonal over heads then assets
    blk2 = jnp.zeros((Wo, 4, 40), f32)
    for h, p in enumerate((p1, p2)):
        w2h = jnp.transpose(p['conv2_w'][:, :, 0, :], (2, 1, 0)).astype(f32)   # (Wo,2,20)
        blk2 = blk2.at[:, 2 * h:2 * h + 2, 20 * h:20 * h + 20].set(w2h)
    blk2 = blk2.reshape(Wo * 4, 40)
    W2 = jnp.zeros((A, Wo * 4, A, 40), f32)
    for a in range(A):
        W2 = W2.at[a, :, a, :].set(blk2)
    W2 = W2.reshape(A * Wo * 4, A * 40)
    b2c = jnp.concatenate([p1['conv2_b'], p2['conv2_b']]).astype(f32)          # (40,)
    b2 = jnp.tile(b2c, (A,)).reshape(1, A * 40)

    # conv3 (1x1): channel part (A*40, 2A), w-channel part (N, 2A), bias (1, 2A)
    blk3 = jnp.zeros((40, 2), f32)
    blk3 = blk3.at[0:20, 0].set(p1['conv3_w'][0, :20, 0, 0].astype(f32))
    blk3 = blk3.at[20:40, 1].set(p2['conv3_w'][0, :20, 0, 0].astype(f32))
    W3 = jnp.zeros((A, 40, A, 2), f32)
    for a in range(A):
        W3 = W3.at[a, :, a, :].set(blk3)
    W3 = W3.reshape(A * 40, A * 2)
    w20 = jnp.stack([p1['conv3_w'][0, 20, 0, 0], p2['conv3_w'][0, 20, 0, 0]]).astype(f32)
    Ww = jnp.zeros((N, A, 2), f32)
    for a in range(A):
        Ww = Ww.at[a + 1, a, :].set(w20)          # row 0 (cash column of w) stays zero
    Ww = Ww.reshape(N, A * 2)
    b3c = jnp.stack([p1['conv3_b'][0], p2['conv3_b'][0]]).astype(f32)
    b3 = jnp.tile(b3c, (A,)).reshape(1, A * 2)

    # fc1: both heads side by side
    Wfc1 = jnp.concatenate([p1['fc1_w'].T, p2['fc1_w'].T], axis=1).astype(f32)  # (N, 2N)
    bfc1 = jnp.concatenate([p1['fc1_b'], p2['fc1_b']]).astype(f32).reshape(1, 2 * N)

    # fc2 split: conv-path weights (2A, 2) and action-path weights (2N, 2), bias (1, 2)
    Wx = jnp.zeros((A, 2, 2), f32)
    Wx = Wx.at[:, 0, 0].set(p1['fc2_w'][0, 1:N].astype(f32))
    Wx = Wx.at[:, 1, 1].set(p2['fc2_w'][0, 1:N].astype(f32))
    Wx = Wx.reshape(A * 2, 2)
    Wta = jnp.zeros((2 * N, 2), f32)
    Wta = Wta.at[0:N, 0].set(p1['fc2_w'][0, N:].astype(f32))
    Wta = Wta.at[N:, 1].set(p2['fc2_w'][0, N:].astype(f32))
    bfc2 = jnp.stack([p1['fc2_b'][0], p2['fc2_b'][0]]).astype(f32).reshape(1, 2)

    return dict(W1=W1, b1=b1, W2=W2, b2=b2, W3=W3, Ww=Ww, b3=b3,
                Wfc1=Wfc1, bfc1=bfc1, Wx=Wx, Wta=Wta, bfc2=bfc2)


def _round_up(x, m):
    return ((x + m - 1) // m) * m


# ----------------------------------------------------------------------------
# Jitted forward: free reshapes only, then one fused Pallas call.
# ----------------------------------------------------------------------------
@jax.jit
def double_critic_pallas(fused, s, w, action):
    f32 = jnp.float32
    B, C, A, W = s.shape
    N = A + 1
    CAW = C * A * W

    # Native-layout inputs (contiguous reshape of s; no transpose, no HBM round trip).
    s2d = s.astype(f32).reshape(B, CAW)
    w2d = w.astype(f32)
    act = action.astype(f32)

    # ---- batch tiling ----
    if B <= 512:
        TB, num_tiles = B, 1               # block == full array: no padding, no constraints
    else:
        # >= 2 grid steps so v7x can shard the batch over both TensorCores; pad last tile.
        TB = min(1024, _round_up(pl.cdiv(B, 2), 8))
        num_tiles = pl.cdiv(B, TB)
        pad = num_tiles * TB - B
        if pad:
            s2d = jnp.pad(s2d, ((0, pad), (0, 0)))
            w2d = jnp.pad(w2d, ((0, pad), (0, 0)))
            act = jnp.pad(act, ((0, pad), (0, 0)))

    def data_spec(cols):
        return pl.BlockSpec((TB, cols), lambda i: (i, 0))

    def const_spec(arr):
        return pl.BlockSpec(arr.shape, lambda i: (0, 0))

    wts = [fused[k] for k in ('W1', 'b1', 'W2', 'b2', 'W3', 'Ww', 'b3',
                              'Wfc1', 'bfc1', 'Wx', 'Wta', 'bfc2')]

    out = pl.pallas_call(
        double_critic_kernel,
        out_shape=jax.ShapeDtypeStruct((num_tiles * TB, 2), f32),
        grid_spec=pltpu.PrefetchScalarGridSpec(
            num_scalar_prefetch=0,
            grid=(num_tiles,),
            in_specs=[data_spec(CAW), data_spec(N), data_spec(N)]
                     + [const_spec(a) for a in wts],
            out_specs=pl.BlockSpec((TB, 2), lambda i: (i, 0)),
        ),
        compiler_params=pltpu.CompilerParams(dimension_semantics=("parallel",)),
    )(s2d, w2d, act, *wts)

    q = out[:B]
    return q[:, 0:1], q[:, 1:2]


# ----------------------------------------------------------------------------
# Pure-JAX reference of the PyTorch forward (for correctness checking)
# ----------------------------------------------------------------------------
def critic_ref(params, s, w, action):
    B, C, A, W = s.shape
    dn = ('NCHW', 'OIHW', 'NCHW')
    x = jax.lax.conv_general_dilated(s, params['conv1_w'], (1, 1), 'VALID',
                                     dimension_numbers=dn)
    x = jax.nn.relu(x + params['conv1_b'][None, :, None, None])
    x = jax.lax.conv_general_dilated(x, params['conv2_w'], (1, 1), 'VALID',
                                     dimension_numbers=dn)
    x = jax.nn.relu(x + params['conv2_b'][None, :, None, None])
    wr = w[:, 1:].reshape(B, 1, A, 1)
    x = jnp.concatenate([x, wr], axis=1)
    x = jax.lax.conv_general_dilated(x, params['conv3_w'], (1, 1), 'VALID',
                                     dimension_numbers=dn)
    x = x + params['conv3_b'][None, :, None, None]
    x = x.reshape(B, A)                                   # .squeeze()
    cash = jnp.zeros((B, 1), jnp.float32)
    x = jnp.concatenate([cash, x], axis=1)
    a = action @ params['fc1_w'].T + params['fc1_b']
    x = jnp.concatenate([x, a], axis=1)
    x = jax.nn.relu(x)
    return x @ params['fc2_w'].T + params['fc2_b']


if __name__ == "__main__":
    in_channels, num_assets, window_length = 4, 8, 16
    A = num_assets - 1

    key = jax.random.PRNGKey(0)
    k_data, k_p1, k_p2 = jax.random.split(key, 3)
    p1 = make_critic_params(k_p1, in_channels, num_assets, window_length)
    p2 = make_critic_params(k_p2, in_channels, num_assets, window_length)

    # Weight fusion is done once, outside the jitted forward (per the perf review).
    fused = fuse_double_critic_params(p1, p2, in_channels, num_assets, window_length)
    fused = jax.device_put(fused)

    # B=2: tiny single-tile path.  B=300: larger single-tile path (no padding, no relayout).
    for B in (2, 300):
        ks, kw, ka = jax.random.split(jax.random.fold_in(k_data, B), 3)
        s = jax.random.normal(ks, (B, in_channels, A, window_length), jnp.float32)
        w_raw = jax.random.uniform(kw, (B, num_assets), jnp.float32) + 0.1
        w = w_raw / jnp.sum(w_raw, axis=1, keepdims=True)
        action = jax.random.normal(ka, (B, num_assets), jnp.float32)

        q1, q2 = double_critic_pallas(fused, s, w, action)
        jax.block_until_ready((q1, q2))

        r1 = critic_ref(p1, s, w, action)
        r2 = critic_ref(p2, s, w, action)
        assert q1.shape == (B, 1) and q2.shape == (B, 1)
        assert jnp.allclose(q1, r1, atol=5e-2, rtol=5e-2), (B, q1[:4], r1[:4])
        assert jnp.allclose(q2, r2, atol=5e-2, rtol=5e-2), (B, q2[:4], r2[:4])

    print("KERNEL_OK")
</pallas_src>

<mosaic_0001>
module attributes {stable_mosaic.version = 11 : i64} {
  func.func @double_critic_kernel(%arg0: i32, %arg1: memref<2x448xf32, #tpu.memory_space<vmem>>, %arg2: memref<2x8xf32, #tpu.memory_space<vmem>>, %arg3: memref<2x8xf32, #tpu.memory_space<vmem>>, %arg4: memref<448x392xf32, #tpu.memory_space<vmem>>, %arg5: memref<1x392xf32, #tpu.memory_space<vmem>>, %arg6: memref<392x280xf32, #tpu.memory_space<vmem>>, %arg7: memref<1x280xf32, #tpu.memory_space<vmem>>, %arg8: memref<280x14xf32, #tpu.memory_space<vmem>>, %arg9: memref<8x14xf32, #tpu.memory_space<vmem>>, %arg10: memref<1x14xf32, #tpu.memory_space<vmem>>, %arg11: memref<8x16xf32, #tpu.memory_space<vmem>>, %arg12: memref<1x16xf32, #tpu.memory_space<vmem>>, %arg13: memref<14x2xf32, #tpu.memory_space<vmem>>, %arg14: memref<16x2xf32, #tpu.memory_space<vmem>>, %arg15: memref<1x2xf32, #tpu.memory_space<vmem>>, %arg16: memref<2x2xf32, #tpu.memory_space<vmem>>) attributes {dimension_semantics = [#tpu.dimension_semantics<parallel>], iteration_bounds = array<i64: 1>, scalar_prefetch = 0 : i64, scratch_operands = 0 : i64, tpu.core_type = #tpu.core_type<tc>, window_params = [{transform_indices = @transform_0, window_bounds = array<i64: 2, 448>}, {transform_indices = @transform_1, window_bounds = array<i64: 2, 8>}, {transform_indices = @transform_2, window_bounds = array<i64: 2, 8>}, {pipeline_mode = #tpu.pipeline_mode<synchronous>, transform_indices = @transform_3, window_bounds = array<i64: 448, 392>}, {pipeline_mode = #tpu.pipeline_mode<synchronous>, transform_indices = @transform_4, window_bounds = array<i64: 1, 392>}, {pipeline_mode = #tpu.pipeline_mode<synchronous>, transform_indices = @transform_5, window_bounds = array<i64: 392, 280>}, {pipeline_mode = #tpu.pipeline_mode<synchronous>, transform_indices = @transform_6, window_bounds = array<i64: 1, 280>}, {pipeline_mode = #tpu.pipeline_mode<synchronous>, transform_indices = @transform_7, window_bounds = array<i64: 280, 14>}, {pipeline_mode = #tpu.pipeline_mode<synchronous>, transform_indices = @transform_8, window_bounds = array<i64: 8, 14>}, {pipeline_mode = #tpu.pipeline_mode<synchronous>, transform_indices = @transform_9, window_bounds = array<i64: 1, 14>}, {pipeline_mode = #tpu.pipeline_mode<synchronous>, transform_indices = @transform_10, window_bounds = array<i64: 8, 16>}, {pipeline_mode = #tpu.pipeline_mode<synchronous>, transform_indices = @transform_11, window_bounds = array<i64: 1, 16>}, {pipeline_mode = #tpu.pipeline_mode<synchronous>, transform_indices = @transform_12, window_bounds = array<i64: 14, 2>}, {pipeline_mode = #tpu.pipeline_mode<synchronous>, transform_indices = @transform_13, window_bounds = array<i64: 16, 2>}, {pipeline_mode = #tpu.pipeline_mode<synchronous>, transform_indices = @transform_14, window_bounds = array<i64: 1, 2>}, {transform_indices = @transform_15, window_bounds = array<i64: 2, 2>}]} {
    %c0 = arith.constant 0 : index
    %c0_0 = arith.constant 0 : index
    %0 = vector.load %arg1[%c0, %c0_0] : memref<2x448xf32, #tpu.memory_space<vmem>>, vector<2x448xf32>
    %c0_1 = arith.constant 0 : index
    %c0_2 = arith.constant 0 : index
    %1 = vector.load %arg4[%c0_1, %c0_2] : memref<448x392xf32, #tpu.memory_space<vmem>>, vector<448x392xf32>
    %cst = arith.constant dense<0.000000e+00> : vector<2x392xf32>
    %2 = tpu.matmul %0, %1, %cst {dimension_numbers = #tpu.dot_dimension_numbers<[1], [0], [0], [1], [0, 0, 1, 1], [], []>} : vector<2x448xf32>, vector<448x392xf32>, vector<2x392xf32> -> vector<2x392xf32>
    %c0_3 = arith.constant 0 : index
    %c0_4 = arith.constant 0 : index
    %3 = vector.load %arg5[%c0_3, %c0_4] : memref<1x392xf32, #tpu.memory_space<vmem>>, vector<1x392xf32>
    %4 = vector.broadcast %3 : vector<1x392xf32> to vector<2x392xf32>
    %5 = arith.addf %2, %4 : vector<2x392xf32>
    %cst_5 = arith.constant 0.000000e+00 : f32
    %6 = vector.broadcast %cst_5 : f32 to vector<2x392xf32>
    %7 = arith.maximumf %5, %6 : vector<2x392xf32>
    %c0_6 = arith.constant 0 : index
    %c0_7 = arith.constant 0 : index
    %8 = vector.load %arg6[%c0_6, %c0_7] : memref<392x280xf32, #tpu.memory_space<vmem>>, vector<392x280xf32>
    %cst_8 = arith.constant dense<0.000000e+00> : vector<2x280xf32>
    %9 = tpu.matmul %7, %8, %cst_8 {dimension_numbers = #tpu.dot_dimension_numbers<[1], [0], [0], [1], [0, 0, 1, 1], [], []>} : vector<2x392xf32>, vector<392x280xf32>, vector<2x280xf32> -> vector<2x280xf32>
    %c0_9 = arith.constant 0 : index
    %c0_10 = arith.constant 0 : index
    %10 = vector.load %arg7[%c0_9, %c0_10] : memref<1x280xf32, #tpu.memory_space<vmem>>, vector<1x280xf32>
    %11 = vector.broadcast %10 : vector<1x280xf32> to vector<2x280xf32>
    %12 = arith.addf %9, %11 : vector<2x280xf32>
    %cst_11 = arith.constant 0.000000e+00 : f32
    %13 = vector.broadcast %cst_11 : f32 to vector<2x280xf32>
    %14 = arith.maximumf %12, %13 : vector<2x280xf32>
    %c0_12 = arith.constant 0 : index
    %c0_13 = arith.constant 0 : index
    %15 = vector.load %arg8[%c0_12, %c0_13] : memref<280x14xf32, #tpu.memory_space<vmem>>, vector<280x14xf32>
    %cst_14 = arith.constant dense<0.000000e+00> : vector<2x14xf32>
    %16 = tpu.matmul %14, %15, %cst_14 {dimension_numbers = #tpu.dot_dimension_numbers<[1], [0], [0], [1], [0, 0, 1, 1], [], []>} : vector<2x280xf32>, vector<280x14xf32>, vector<2x14xf32> -> vector<2x14xf32>
    %c0_15 = arith.constant 0 : index
    %c0_16 = arith.constant 0 : index
    %17 = vector.load %arg2[%c0_15, %c0_16] : memref<2x8xf32, #tpu.memory_space<vmem>>, vector<2x8xf32>
    %c0_17 = arith.constant 0 : index
    %c0_18 = arith.constant 0 : index
    %18 = vector.load %arg9[%c0_17, %c0_18] : memref<8x14xf32, #tpu.memory_space<vmem>>, vector<8x14xf32>
    %cst_19 = arith.constant dense<0.000000e+00> : vector<2x14xf32>
    %19 = tpu.matmul %17, %18, %cst_19 {dimension_numbers = #tpu.dot_dimension_numbers<[1], [0], [0], [1], [0, 0, 1, 1], [], []>} : vector<2x8xf32>, vector<8x14xf32>, vector<2x14xf32> -> vector<2x14xf32>
    %20 = arith.addf %16, %19 : vector<2x14xf32>
    %c0_20 = arith.constant 0 : index
    %c0_21 = arith.constant 0 : index
    %21 = vector.load %arg10[%c0_20, %c0_21] : memref<1x14xf32, #tpu.memory_space<vmem>>, vector<1x14xf32>
    %22 = vector.broadcast %21 : vector<1x14xf32> to vector<2x14xf32>
    %23 = arith.addf %20, %22 : vector<2x14xf32>
    %cst_22 = arith.constant 0.000000e+00 : f32
    %24 = vector.broadcast %cst_22 : f32 to vector<2x14xf32>
    %25 = arith.maximumf %23, %24 : vector<2x14xf32>
    %c0_23 = arith.constant 0 : index
    %c0_24 = arith.constant 0 : index
    %26 = vector.load %arg3[%c0_23, %c0_24] : memref<2x8xf32, #tpu.memory_space<vmem>>, vector<2x8xf32>
    %c0_25 = arith.constant 0 : index
    %c0_26 = arith.constant 0 : index
    %27 = vector.load %arg11[%c0_25, %c0_26] : memref<8x16xf32, #tpu.memory_space<vmem>>, vector<8x16xf32>
    %cst_27 = arith.constant dense<0.000000e+00> : vector<2x16xf32>
    %28 = tpu.matmul %26, %27, %cst_27 {dimension_numbers = #tpu.dot_dimension_numbers<[1], [0], [0], [1], [0, 0, 1, 1], [], []>} : vector<2x8xf32>, vector<8x16xf32>, vector<2x16xf32> -> vector<2x16xf32>
    %c0_28 = arith.constant 0 : index
    %c0_29 = arith.constant 0 : index
    %29 = vector.load %arg12[%c0_28, %c0_29] : memref<1x16xf32, #tpu.memory_space<vmem>>, vector<1x16xf32>
    %30 = vector.broadcast %29 : vector<1x16xf32> to vector<2x16xf32>
    %31 = arith.addf %28, %30 : vector<2x16xf32>
    %cst_30 = arith.constant 0.000000e+00 : f32
    %32 = vector.broadcast %cst_30 : f32 to vector<2x16xf32>
    %33 = arith.maximumf %31, %32 : vector<2x16xf32>
    %c0_31 = arith.constant 0 : index
    %c0_32 = arith.constant 0 : index
    %34 = vector.load %arg13[%c0_31, %c0_32] : memref<14x2xf32, #tpu.memory_space<vmem>>, vector<14x2xf32>
    %cst_33 = arith.constant dense<0.000000e+00> : vector<2x2xf32>
    %35 = tpu.matmul %25, %34, %cst_33 {dimension_numbers = #tpu.dot_dimension_numbers<[1], [0], [0], [1], [0, 0, 1, 1], [], []>} : vector<2x14xf32>, vector<14x2xf32>, vector<2x2xf32> -> vector<2x2xf32>
    %c0_34 = arith.constant 0 : index
    %c0_35 = arith.constant 0 : index
    %36 = vector.load %arg14[%c0_34, %c0_35] : memref<16x2xf32, #tpu.memory_space<vmem>>, vector<16x2xf32>
    %cst_36 = arith.constant dense<0.000000e+00> : vector<2x2xf32>
    %37 = tpu.matmul %33, %36, %cst_36 {dimension_numbers = #tpu.dot_dimension_numbers<[1], [0], [0], [1], [0, 0, 1, 1], [], []>} : vector<2x16xf32>, vector<16x2xf32>, vector<2x2xf32> -> vector<2x2xf32>
    %38 = arith.addf %35, %37 : vector<2x2xf32>
    %c0_37 = arith.constant 0 : index
    %c0_38 = arith.constant 0 : index
    %39 = vector.load %arg15[%c0_37, %c0_38] : memref<1x2xf32, #tpu.memory_space<vmem>>, vector<1x2xf32>
    %40 = vector.broadcast %39 : vector<1x2xf32> to vector<2x2xf32>
    %41 = arith.addf %38, %40 : vector<2x2xf32>
    %c0_39 = arith.constant 0 : index
    %c0_40 = arith.constant 0 : index
    %42 = vector.load %arg16[%c0_39, %c0_40] : memref<2x2xf32, #tpu.memory_space<vmem>>, vector<2x2xf32>
    tpu.vector_store %arg16[%c0_39, %c0_40], %41 {strides = array<i32>} : memref<2x2xf32, #tpu.memory_space<vmem>>, vector<2x2xf32>,
    return
  }
  func.func @transform_0(%arg0: i32) -> (i32, i32) {
    %c0_i32 = arith.constant 0 : i32
    %c0_i32_0 = arith.constant 0 : i32
    return %arg0, %c0_i32 : i32, i32
  }
  func.func @transform_1(%arg0: i32) -> (i32, i32) {
    %c0_i32 = arith.constant 0 : i32
    %c0_i32_0 = arith.constant 0 : i32
    return %arg0, %c0_i32 : i32, i32
  }
  func.func @transform_2(%arg0: i32) -> (i32, i32) {
    %c0_i32 = arith.constant 0 : i32
    %c0_i32_0 = arith.constant 0 : i32
    return %arg0, %c0_i32 : i32, i32
  }
  func.func @transform_3(%arg0: i32) -> (i32, i32) {
    %c0_i32 = arith.constant 0 : i32
    %c0_i32_0 = arith.constant 0 : i32
    %c0_i32_1 = arith.constant 0 : i32
    return %c0_i32, %c0_i32_0 : i32, i32
  }
  func.func @transform_4(%arg0: i32) -> (i32, i32) {
    %c0_i32 = arith.constant 0 : i32
    %c0_i32_0 = arith.constant 0 : i32
    %c0_i32_1 = arith.constant 0 : i32
    return %c0_i32, %c0_i32_0 : i32, i32
  }
  func.func @transform_5(%arg0: i32) -> (i32, i32) {
    %c0_i32 = arith.constant 0 : i32
    %c0_i32_0 = arith.constant 0 : i32
    %c0_i32_1 = arith.constant 0 : i32
    return %c0_i32, %c0_i32_0 : i32, i32
  }
  func.func @transform_6(%arg0: i32) -> (i32, i32) {
    %c0_i32 = arith.constant 0 : i32
    %c0_i32_0 = arith.constant 0 : i32
    %c0_i32_1 = arith.constant 0 : i32
    return %c0_i32, %c0_i32_0 : i32, i32
  }
  func.func @transform_7(%arg0: i32) -> (i32, i32) {
    %c0_i32 = arith.constant 0 : i32
    %c0_i32_0 = arith.constant 0 : i32
    %c0_i32_1 = arith.constant 0 : i32
    return %c0_i32, %c0_i32_0 : i32, i32
  }
  func.func @transform_8(%arg0: i32) -> (i32, i32) {
    %c0_i32 = arith.constant 0 : i32
    %c0_i32_0 = arith.constant 0 : i32
    %c0_i32_1 = arith.constant 0 : i32
    return %c0_i32, %c0_i32_0 : i32, i32
  }
  func.func @transform_9(%arg0: i32) -> (i32, i32) {
    %c0_i32 = arith.constant 0 : i32
    %c0_i32_0 = arith.constant 0 : i32
    %c0_i32_1 = arith.constant 0 : i32
    return %c0_i32, %c0_i32_0 : i32, i32
  }
  func.func @transform_10(%arg0: i32) -> (i32, i32) {
    %c0_i32 = arith.constant 0 : i32
    %c0_i32_0 = arith.constant 0 : i32
    %c0_i32_1 = arith.constant 0 : i32
    return %c0_i32, %c0_i32_0 : i32, i32
  }
  func.func @transform_11(%arg0: i32) -> (i32, i32) {
    %c0_i32 = arith.constant 0 : i32
    %c0_i32_0 = arith.constant 0 : i32
    %c0_i32_1 = arith.constant 0 : i32
    return %c0_i32, %c0_i32_0 : i32, i32
  }
  func.func @transform_12(%arg0: i32) -> (i32, i32) {
    %c0_i32 = arith.constant 0 : i32
    %c0_i32_0 = arith.constant 0 : i32
    %c0_i32_1 = arith.constant 0 : i32
    return %c0_i32, %c0_i32_0 : i32, i32
  }
  func.func @transform_13(%arg0: i32) -> (i32, i32) {
    %c0_i32 = arith.constant 0 : i32
    %c0_i32_0 = arith.constant 0 : i32
    %c0_i32_1 = arith.constant 0 : i32
    return %c0_i32, %c0_i32_0 : i32, i32
  }
  func.func @transform_14(%arg0: i32) -> (i32, i32) {
    %c0_i32 = arith.constant 0 : i32
    %c0_i32_0 = arith.constant 0 : i32
    %c0_i32_1 = arith.constant 0 : i32
    return %c0_i32, %c0_i32_0 : i32, i32
  }
  func.func @transform_15(%arg0: i32) -> (i32, i32) {
    %c0_i32 = arith.constant 0 : i32
    %c0_i32_0 = arith.constant 0 : i32
    return %arg0, %c0_i32 : i32, i32
  }
}

</mosaic_0001>

<llo_original>
// kernel: double_critic_pallas.1
$region0: #{double_critic_pallas.1}
  #allocation0 [shape = 'u32[]', space=smem, size = 0x4, offset = 0x4, fixed_abs, tag = 'smem constant byte address 0x4 - core index']
  #allocation1 [shape = 'u32[144,128]{1,0:T(1,128)}', space=vmem, size = 0x12000, scoped, tag = 'internal scratch']
  %s0 = inlined_call_operand.vmem [shape: f32[2,448], index: 0, kind: input, shape index: {}]
  %s1 = inlined_call_operand.vmem [shape: f32[2,8], index: 1, kind: input, shape index: {}]
  %s2 = inlined_call_operand.vmem [shape: f32[2,8], index: 2, kind: input, shape index: {}]
  %s3 = inlined_call_operand.vmem [shape: f32[448,392], index: 3, kind: input, shape index: {}]
  %s4 = inlined_call_operand.vmem [shape: f32[1,392], index: 4, kind: input, shape index: {}]
  %s5 = inlined_call_operand.vmem [shape: f32[392,280], index: 5, kind: input, shape index: {}]
  %s6 = inlined_call_operand.vmem [shape: f32[1,280], index: 6, kind: input, shape index: {}]
  %s7 = inlined_call_operand.vmem [shape: f32[280,14], index: 7, kind: input, shape index: {}]
  %s8 = inlined_call_operand.vmem [shape: f32[8,14], index: 8, kind: input, shape index: {}]
  %s9 = inlined_call_operand.vmem [shape: f32[1,14], index: 9, kind: input, shape index: {}]
  %s10 = inlined_call_operand.vmem [shape: f32[8,16], index: 10, kind: input, shape index: {}]
  %s11 = inlined_call_operand.vmem [shape: f32[1,16], index: 11, kind: input, shape index: {}]
  %s12 = inlined_call_operand.vmem [shape: f32[14,2], index: 12, kind: input, shape index: {}]
  %s13 = inlined_call_operand.vmem [shape: f32[16,2], index: 13, kind: input, shape index: {}]
  %s14 = inlined_call_operand.vmem [shape: f32[1,2], index: 14, kind: input, shape index: {}]
  %s15 = inlined_call_operand.vmem [shape: f32[2,2], index: 15, kind: output, shape index: {}]
  %s16 = sld [smem:[#allocation0]]
  $region70: #{double_critic_pallas.1} parent=0
    _
  %s18 = ssub.s32 1, %s16
  %s19 = scalar_select 0, %s18, %s16
  // Predicated region
  $region2: #{double_critic_pallas.1} parent=0 // pred_check
    _
  $region3: #{double_critic_pallas.1} parent=0 // pred_check_branch
    %21 = sbr.rel (0) target = $region5
  $region4: #{double_critic_pallas.1} parent=0 // pred_region
    _
  $region5: #{double_critic_pallas.1} parent=0 // pred_fallthru
    _
  // Predicated region
  $region6: #{double_critic_pallas.1} parent=0 // pred_check
    _
  $region7: #{double_critic_pallas.1} parent=0 // pred_check_branch
    %23 = sbr.rel (0) target = $region9
  $region8: #{double_critic_pallas.1} parent=0 // pred_region
    _
  $region9: #{double_critic_pallas.1} parent=0 // pred_fallthru
    _
  // Predicated region
  $region10: #{double_critic_pallas.1} parent=0 // pred_check
    _
  $region11: #{double_critic_pallas.1} parent=0 // pred_check_branch
    %25 = sbr.rel (0) target = $region13
  $region12: #{double_critic_pallas.1} parent=0 // pred_region
    _
  $region13: #{double_critic_pallas.1} parent=0 // pred_fallthru
    _
  // Predicated region
  $region14: #{double_critic_pallas.1} parent=0 // pred_check
    _
  $region15: #{double_critic_pallas.1} parent=0 // pred_check_branch
    %27 = sbr.rel (0) target = $region17
  $region16: #{double_critic_pallas.1} parent=0 // pred_region
    _
  $region17: #{double_critic_pallas.1} parent=0 // pred_fallthru
    _
  // Predicated region
  $region18: #{double_critic_pallas.1} parent=0 // pred_check
    _
  $region19: #{double_critic_pallas.1} parent=0 // pred_check_branch
    %29 = sbr.rel (0) target = $region21
  $region20: #{double_critic_pallas.1} parent=0 // pred_region
    _
  $region21: #{double_critic_pallas.1} parent=0 // pred_fallthru
    _
  // Predicated region
  $region22: #{double_critic_pallas.1} parent=0 // pred_check
    _
  $region23: #{double_critic_pallas.1} parent=0 // pred_check_branch
    %31 = sbr.rel (0) target = $region25
  $region24: #{double_critic_pallas.1} parent=0 // pred_region
    _
  $region25: #{double_critic_pallas.1} parent=0 // pred_fallthru
    _
  // Predicated region
  $region26: #{double_critic_pallas.1} parent=0 // pred_check
    _
  $region27: #{double_critic_pallas.1} parent=0 // pred_check_branch
    %33 = sbr.rel (0) target = $region29
  $region28: #{double_critic_pallas.1} parent=0 // pred_region
    _
  $region29: #{double_critic_pallas.1} parent=0 // pred_fallthru
    _
  // Predicated region
  $region30: #{double_critic_pallas.1} parent=0 // pred_check
    _
  $region31: #{double_critic_pallas.1} parent=0 // pred_check_branch
    %35 = sbr.rel (0) target = $region33
  $region32: #{double_critic_pallas.1} parent=0 // pred_region
    _
  $region33: #{double_critic_pallas.1} parent=0 // pred_fallthru
    _
  // Predicated region
  $region34: #{double_critic_pallas.1} parent=0 // pred_check
    _
  $region35: #{double_critic_pallas.1} parent=0 // pred_check_branch
    %37 = sbr.rel (0) target = $region37
  $region36: #{double_critic_pallas.1} parent=0 // pred_region
    _
  $region37: #{double_critic_pallas.1} parent=0 // pred_fallthru
    _
  // Predicated region
  $region38: #{double_critic_pallas.1} parent=0 // pred_check
    _
  $region39: #{double_critic_pallas.1} parent=0 // pred_check_branch
    %39 = sbr.rel (0) target = $region41
  $region40: #{double_critic_pallas.1} parent=0 // pred_region
    _
  $region41: #{double_critic_pallas.1} parent=0 // pred_fallthru
    _
  // Predicated region
  $region42: #{double_critic_pallas.1} parent=0 // pred_check
    _
  $region43: #{double_critic_pallas.1} parent=0 // pred_check_branch
    %41 = sbr.rel (0) target = $region45
  $region44: #{double_critic_pallas.1} parent=0 // pred_region
    _
  $region45: #{double_critic_pallas.1} parent=0 // pred_fallthru
    _
  // Predicated region
  $region46: #{double_critic_pallas.1} parent=0 // pred_check
    _
  $region47: #{double_critic_pallas.1} parent=0 // pred_check_branch
    %43 = sbr.rel (0) target = $region49
  $region48: #{double_critic_pallas.1} parent=0 // pred_region
    _
  $region49: #{double_critic_pallas.1} parent=0 // pred_fallthru
    _
  // Predicated region
  $region50: #{double_critic_pallas.1} parent=0 // pred_check
    _
  $region51: #{double_critic_pallas.1} parent=0 // pred_check_branch
    %45 = sbr.rel (0) target = $region53
  $region52: #{double_critic_pallas.1} parent=0 // pred_region
    _
  $region53: #{double_critic_pallas.1} parent=0 // pred_fallthru
    _
  // Predicated region
  $region54: #{double_critic_pallas.1} parent=0 // pred_check
    _
  $region55: #{double_critic_pallas.1} parent=0 // pred_check_branch
    %47 = sbr.rel (0) target = $region57
  $region56: #{double_critic_pallas.1} parent=0 // pred_region
    _
  $region57: #{double_critic_pallas.1} parent=0 // pred_fallthru
    _
  // Predicated region
  $region58: #{double_critic_pallas.1} parent=0 // pred_check
    _
  $region59: #{double_critic_pallas.1} parent=0 // pred_check_branch
    %49 = sbr.rel (0) target = $region61
  $region60: #{double_critic_pallas.1} parent=0 // pred_region
    _
  $region61: #{double_critic_pallas.1} parent=0 // pred_fallthru
    _
  %v50 = vld [vmem:[%s0] sm:$0xff]
  %v51 = vld [vmem:[%s3] sm:$0xff]
  %v52 = vld [vmem:[%s3 + $0x8] sm:$0xff]
  %v53 = vld [vmem:[%s3 + $0x10] sm:$0xff]
  %v54 = vld [vmem:[%s3 + $0x18] sm:$0xff]
  %v55 = vld [vmem:[%s3 + $0x20] sm:$0xff]
  %v56 = vld [vmem:[%s3 + $0x28] sm:$0xff]
  %v57 = vld [vmem:[%s3 + $0x30] sm:$0xff]
  %v58 = vld [vmem:[%s3 + $0x38] sm:$0xff]
  %v59 = vld [vmem:[%s3 + $0x40] sm:$0xff]
  %v60 = vld [vmem:[%s3 + $0x48] sm:$0xff]
  %v61 = vld [vmem:[%s3 + $0x50] sm:$0xff]
  %v62 = vld [vmem:[%s3 + $0x58] sm:$0xff]
  %v63 = vld [vmem:[%s3 + $0x60] sm:$0xff]
  %v64 = vld [vmem:[%s3 + $0x68] sm:$0xff]
  %v65 = vld [vmem:[%s3 + $0x70] sm:$0xff]
  %v66 = vld [vmem:[%s3 + $0x78] sm:$0xff]
  %v67 = vld [vmem:[%s3 + $0x80] sm:$0xff]
  %v68 = vld [vmem:[%s3 + $0x88] sm:$0xff]
  %v69 = vld [vmem:[%s3 + $0x90] sm:$0xff]
  %v70 = vld [vmem:[%s3 + $0x98] sm:$0xff]
  %v71 = vld [vmem:[%s3 + $0xa0] sm:$0xff]
  %v72 = vld [vmem:[%s3 + $0xa8] sm:$0xff]
  %v73 = vld [vmem:[%s3 + $0xb0] sm:$0xff]
  %v74 = vld [vmem:[%s3 + $0xb8] sm:$0xff]
  %v75 = vld [vmem:[%s3 + $0xc0] sm:$0xff]
  %v76 = vld [vmem:[%s3 + $0xc8] sm:$0xff]
  %v77 = vld [vmem:[%s3 + $0xd0] sm:$0xff]
  %v78 = vld [vmem:[%s3 + $0xd8] sm:$0xff]
  %v79 = vld [vmem:[%s3 + $0xe0] sm:$0xff]
  %v80 = vld [vmem:[%s3 + $0xe8] sm:$0xff]
  %v81 = vld [vmem:[%s3 + $0xf0] sm:$0xff]
  %v82 = vld [vmem:[%s3 + $0xf8] sm:$0xff]
  %v83 = vld [vmem:[%s3 + $0x100] sm:$0xff]
  %v84 = vld [vmem:[%s3 + $0x108] sm:$0xff]
  %v85 = vld [vmem:[%s3 + $0x110] sm:$0xff]
  %v86 = vld [vmem:[%s3 + $0x118] sm:$0xff]
  %v87 = vld [vmem:[%s3 + $0x120] sm:$0xff]
  %v88 = vld [vmem:[%s3 + $0x128] sm:$0xff]
  %v89 = vld [vmem:[%s3 + $0x130] sm:$0xff]
  %v90 = vld [vmem:[%s3 + $0x138] sm:$0xff]
  %v91 = vld [vmem:[%s3 + $0x140] sm:$0xff]
  %v92 = vld [vmem:[%s3 + $0x148] sm:$0xff]
  %v93 = vld [vmem:[%s3 + $0x150] sm:$0xff]
  %v94 = vld [vmem:[%s3 + $0x158] sm:$0xff]
  %v95 = vld [vmem:[%s3 + $0x160] sm:$0xff]
  %v96 = vld [vmem:[%s3 + $0x168] sm:$0xff]
  %v97 = vld [vmem:[%s3 + $0x170] sm:$0xff]
  %v98 = vld [vmem:[%s3 + $0x178] sm:$0xff]
  %v99 = vld [vmem:[%s3 + $0x180] sm:$0xff]
  %v100 = vld [vmem:[%s3 + $0x188] sm:$0xff]
  %v101 = vld [vmem:[%s3 + $0x190] sm:$0xff]
  %v102 = vld [vmem:[%s3 + $0x198] sm:$0xff]
  %v103 = vld [vmem:[%s3 + $0x1a0] sm:$0xff]
  %v104 = vld [vmem:[%s3 + $0x1a8] sm:$0xff]
  %v105 = vld [vmem:[%s3 + $0x1b0] sm:$0xff]
  %v106 = vld [vmem:[%s3 + $0x1b8] sm:$0xff]
  %v107 = vld [vmem:[%s3 + $0x1c0] sm:$0xff]
  %v108 = vld [vmem:[%s3 + $0x1c8] sm:$0xff]
  %v109 = vld [vmem:[%s3 + $0x1d0] sm:$0xff]
  %v110 = vld [vmem:[%s3 + $0x1d8] sm:$0xff]
  %v111 = vld [vmem:[%s3 + $0x1e0] sm:$0xff]
  %v112 = vld [vmem:[%s3 + $0x1e8] sm:$0xff]
  %v113 = vld [vmem:[%s3 + $0x1f0] sm:$0xff]
  %v114 = vld [vmem:[%s3 + $0x1f8] sm:$0xff]
  %v115 = vld [vmem:[%s3 + $0x200] sm:$0xff]
  %v116 = vld [vmem:[%s3 + $0x208] sm:$0xff]
  %v117 = vld [vmem:[%s3 + $0x210] sm:$0xff]
  %v118 = vld [vmem:[%s3 + $0x218] sm:$0xff]
  %v119 = vld [vmem:[%s3 + $0x220] sm:$0xff]
  %v120 = vld [vmem:[%s3 + $0x228] sm:$0xff]
  %v121 = vld [vmem:[%s3 + $0x230] sm:$0xff]
  %v122 = vld [vmem:[%s3 + $0x238] sm:$0xff]
  %v123 = vld [vmem:[%s3 + $0x240] sm:$0xff]
  %v124 = vld [vmem:[%s3 + $0x248] sm:$0xff]
  %v125 = vld [vmem:[%s3 + $0x250] sm:$0xff]
  %v126 = vld [vmem:[%s3 + $0x258] sm:$0xff]
  %v127 = vld [vmem:[%s3 + $0x260] sm:$0xff]
  %v128 = vld [vmem:[%s3 + $0x268] sm:$0xff]
  %v129 = vld [vmem:[%s3 + $0x270] sm:$0xff]
  %v130 = vld [vmem:[%s3 + $0x278] sm:$0xff]
  %v131 = vld [vmem:[%s3 + $0x280] sm:$0xff]
  %v132 = vld [vmem:[%s3 + $0x288] sm:$0xff]
  %v133 = vld [vmem:[%s3 + $0x290] sm:$0xff]
  %v134 = vld [vmem:[%s3 + $0x298] sm:$0xff]
  %v135 = vld [vmem:[%s3 + $0x2a0] sm:$0xff]
  %v136 = vld [vmem:[%s3 + $0x2a8] sm:$0xff]
  %v137 = vld [vmem:[%s3 + $0x2b0] sm:$0xff]
  %v138 = vld [vmem:[%s3 + $0x2b8] sm:$0xff]
  %v139 = vld [vmem:[%s3 + $0x2c0] sm:$0xff]
  %v140 = vld [vmem:[%s3 + $0x2c8] sm:$0xff]
  %v141 = vld [vmem:[%s3 + $0x2d0] sm:$0xff]
  %v142 = vld [vmem:[%s3 + $0x2d8] sm:$0xff]
  %v143 = vld [vmem:[%s3 + $0x2e0] sm:$0xff]
  %v144 = vld [vmem:[%s3 + $0x2e8] sm:$0xff]
  %v145 = vld [vmem:[%s3 + $0x2f0] sm:$0xff]
  %v146 = vld [vmem:[%s3 + $0x2f8] sm:$0xff]
  %v147 = vld [vmem:[%s3 + $0x300] sm:$0xff]
  %v148 = vld [vmem:[%s3 + $0x308] sm:$0xff]
  %v149 = vld [vmem:[%s3 + $0x310] sm:$0xff]
  %v150 = vld [vmem:[%s3 + $0x318] sm:$0xff]
  %v151 = vld [vmem:[%s3 + $0x320] sm:$0xff]
  %v152 = vld [vmem:[%s3 + $0x328] sm:$0xff]
  %v153 = vld [vmem:[%s3 + $0x330] sm:$0xff]
  %v154 = vld [vmem:[%s3 + $0x338] sm:$0xff]
  %v155 = vld [vmem:[%s3 + $0x340] sm:$0xff]
  %v156 = vld [vmem:[%s3 + $0x348] sm:$0xff]
  %v157 = vld [vmem:[%s3 + $0x350] sm:$0xff]
  %v158 = vld [vmem:[%s3 + $0x358] sm:$0xff]
  %v159 = vld [vmem:[%s3 + $0x360] sm:$0xff]
  %v160 = vld [vmem:[%s3 + $0x368] sm:$0xff]
  %v161 = vld [vmem:[%s3 + $0x370] sm:$0xff]
  %v162 = vld [vmem:[%s3 + $0x378] sm:$0xff]
  %v163 = vld [vmem:[%s3 + $0x380] sm:$0xff]
  %v164 = vld [vmem:[%s3 + $0x388] sm:$0xff]
  %v165 = vld [vmem:[%s3 + $0x390] sm:$0xff]
  %v166 = vld [vmem:[%s3 + $0x398] sm:$0xff]
  %v167 = vld [vmem:[%s3 + $0x3a0] sm:$0xff]
  %v168 = vld [vmem:[%s3 + $0x3a8] sm:$0xff]
  %v169 = vld [vmem:[%s3 + $0x3b0] sm:$0xff]
  %v170 = vld [vmem:[%s3 + $0x3b8] sm:$0xff]
  %v171 = vld [vmem:[%s3 + $0x3c0] sm:$0xff]
  %v172 = vld [vmem:[%s3 + $0x3c8] sm:$0xff]
  %v173 = vld [vmem:[%s3 + $0x3d0] sm:$0xff]
  %v174 = vld [vmem:[%s3 + $0x3d8] sm:$0xff]
  %v175 = vld [vmem:[%s3 + $0x3e0] sm:$0xff]
  %v176 = vld [vmem:[%s3 + $0x3e8] sm:$0xff]
  %v177 = vld [vmem:[%s3 + $0x3f0] sm:$0xff]
  %v178 = vld [vmem:[%s3 + $0x3f8] sm:$0xff]
  %v179 = vld [vmem:[%s3 + $0x400] sm:$0xff]
  %v180 = vld [vmem:[%s3 + $0x408] sm:$0xff]
  %v181 = vld [vmem:[%s3 + $0x410] sm:$0xff]
  %v182 = vld [vmem:[%s3 + $0x418] sm:$0xff]
  %v183 = vld [vmem:[%s3 + $0x420] sm:$0xff]
  %v184 = vld [vmem:[%s3 + $0x428] sm:$0xff]
  %v185 = vld [vmem:[%s3 + $0x430] sm:$0xff]
  %v186 = vld [vmem:[%s3 + $0x438] sm:$0xff]
  %v187 = vld [vmem:[%s3 + $0x440] sm:$0xff]
  %v188 = vld [vmem:[%s3 + $0x448] sm:$0xff]
  %v189 = vld [vmem:[%s3 + $0x450] sm:$0xff]
  %v190 = vld [vmem:[%s3 + $0x458] sm:$0xff]
  %v191 = vld [vmem:[%s3 + $0x460] sm:$0xff]
  %v192 = vld [vmem:[%s3 + $0x468] sm:$0xff]
  %v193 = vld [vmem:[%s3 + $0x470] sm:$0xff]
  %v194 = vld [vmem:[%s3 + $0x478] sm:$0xff]
  %v195 = vld [vmem:[%s3 + $0x480] sm:$0xff]
  %v196 = vld [vmem:[%s3 + $0x488] sm:$0xff]
  %v197 = vld [vmem:[%s3 + $0x490] sm:$0xff]
  %v198 = vld [vmem:[%s3 + $0x498] sm:$0xff]
  %v199 = vld [vmem:[%s3 + $0x4a0] sm:$0xff]
  %v200 = vld [vmem:[%s3 + $0x4a8] sm:$0xff]
  %v201 = vld [vmem:[%s3 + $0x4b0] sm:$0xff]
  %v202 = vld [vmem:[%s3 + $0x4b8] sm:$0xff]
  %v203 = vld [vmem:[%s3 + $0x4c0] sm:$0xff]
  %v204 = vld [vmem:[%s3 + $0x4c8] sm:$0xff]
  %v205 = vld [vmem:[%s3 + $0x4d0] sm:$0xff]
  %v206 = vld [vmem:[%s3 + $0x4d8] sm:$0xff]
  %v207 = vld [vmem:[%s3 + $0x4e0] sm:$0xff]
  %v208 = vld [vmem:[%s3 + $0x4e8] sm:$0xff]
  %v209 = vld [vmem:[%s3 + $0x4f0] sm:$0xff]
  %v210 = vld [vmem:[%s3 + $0x4f8] sm:$0xff]
  %v211 = vld [vmem:[%s3 + $0x500] sm:$0xff]
  %v212 = vld [vmem:[%s3 + $0x508] sm:$0xff]
  %v213 = vld [vmem:[%s3 + $0x510] sm:$0xff]
  %v214 = vld [vmem:[%s3 + $0x518] sm:$0xff]
  %v215 = vld [vmem:[%s3 + $0x520] sm:$0xff]
  %v216 = vld [vmem:[%s3 + $0x528] sm:$0xff]
  %v217 = vld [vmem:[%s3 + $0x530] sm:$0xff]
  %v218 = vld [vmem:[%s3 + $0x538] sm:$0xff]
  %v219 = vld [vmem:[%s3 + $0x540] sm:$0xff]
  %v220 = vld [vmem:[%s3 + $0x548] sm:$0xff]
  %v221 = vld [vmem:[%s3 + $0x550] sm:$0xff]
  %v222 = vld [vmem:[%s3 + $0x558] sm:$0xff]
  %v223 = vld [vmem:[%s3 + $0x560] sm:$0xff]
  %v224 = vld [vmem:[%s3 + $0x568] sm:$0xff]
  %v225 = vld [vmem:[%s3 + $0x570] sm:$0xff]
  %v226 = vld [vmem:[%s3 + $0x578] sm:$0xff]
  %v227 = vld [vmem:[%s3 + $0x580] sm:$0xff]
  %v228 = vld [vmem:[%s3 + $0x588] sm:$0xff]
  %v229 = vld [vmem:[%s3 + $0x590] sm:$0xff]
  %v230 = vld [vmem:[%s3 + $0x598] sm:$0xff]
  %v231 = vld [vmem:[%s3 + $0x5a0] sm:$0xff]
  %v232 = vld [vmem:[%s3 + $0x5a8] sm:$0xff]
  %v233 = vld [vmem:[%s3 + $0x5b0] sm:$0xff]
  %v234 = vld [vmem:[%s3 + $0x5b8] sm:$0xff]
  %v235 = vld [vmem:[%s3 + $0x5c0] sm:$0xff]
  %v236 = vld [vmem:[%s3 + $0x5c8] sm:$0xff]
  %v237 = vld [vmem:[%s3 + $0x5d0] sm:$0xff]
  %v238 = vld [vmem:[%s3 + $0x5d8] sm:$0xff]
  %v239 = vld [vmem:[%s3 + $0x5e0] sm:$0xff]
  %v240 = vld [vmem:[%s3 + $0x5e8] sm:$0xff]
  %v241 = vld [vmem:[%s3 + $0x5f0] sm:$0xff]
  %v242 = vld [vmem:[%s3 + $0x5f8] sm:$0xff]
  %v243 = vld [vmem:[%s3 + $0x600] sm:$0xff]
  %v244 = vld [vmem:[%s3 + $0x608] sm:$0xff]
  %v245 = vld [vmem:[%s3 + $0x610] sm:$0xff]
  %v246 = vld [vmem:[%s3 + $0x618] sm:$0xff]
  %v247 = vld [vmem:[%s3 + $0x620] sm:$0xff]
  %v248 = vld [vmem:[%s3 + $0x628] sm:$0xff]
  %v249 = vld [vmem:[%s3 + $0x630] sm:$0xff]
  %v250 = vld [vmem:[%s3 + $0x638] sm:$0xff]
  %v251 = vld [vmem:[%s3 + $0x640] sm:$0xff]
  %v252 = vld [vmem:[%s3 + $0x648] sm:$0xff]
  %v253 = vld [vmem:[%s3 + $0x650] sm:$0xff]
  %v254 = vld [vmem:[%s3 + $0x658] sm:$0xff]
  %v255 = vld [vmem:[%s3 + $0x660] sm:$0xff]
  %v256 = vld [vmem:[%s3 + $0x668] sm:$0xff]
  %v257 = vld [vmem:[%s3 + $0x670] sm:$0xff]
  %v258 = vld [vmem:[%s3 + $0x678] sm:$0xff]
  %v259 = vld [vmem:[%s3 + $0x680] sm:$0xff]
  %v260 = vld [vmem:[%s3 + $0x688] sm:$0xff]
  %v261 = vld [vmem:[%s3 + $0x690] sm:$0xff]
  %v262 = vld [vmem:[%s3 + $0x698] sm:$0xff]
  %v263 = vld [vmem:[%s3 + $0x6a0] sm:$0xff]
  %v264 = vld [vmem:[%s3 + $0x6a8] sm:$0xff]
  %v265 = vld [vmem:[%s3 + $0x6b0] sm:$0xff]
  %v266 = vld [vmem:[%s3 + $0x6b8] sm:$0xff]
  %v267 = vld [vmem:[%s3 + $0x6c0] sm:$0xff]
  %v268 = vld [vmem:[%s3 + $0x6c8] sm:$0xff]
  %v269 = vld [vmem:[%s3 + $0x6d0] sm:$0xff]
  %v270 = vld [vmem:[%s3 + $0x6d8] sm:$0xff]
  %v271 = vld [vmem:[%s3 + $0x6e0] sm:$0xff]
  %v272 = vld [vmem:[%s3 + $0x6e8] sm:$0xff]
  %v273 = vld [vmem:[%s3 + $0x6f0] sm:$0xff]
  %v274 = vld [vmem:[%s3 + $0x6f8] sm:$0xff]
  %v275 = vld [vmem:[%s4] sm:$0xf]
  %v277 = vlaneseq
  %v278 = vshrl.u32 %v277, 7
  %v279 = vsub.s32 0, %v278
  %v280 = vrot.slane %v275, %v279
  %v281 = vlaneseq
  %v282 = vshrl.u32 %v281, 7
  %v283 = vsub.s32 1, %v282
  %v284 = vrot.slane %v275, %v283
  %v285 = vlaneseq
  %v286 = vshrl.u32 %v285, 7
  %v287 = vsub.s32 2, %v286
  %v288 = vrot.slane %v275, %v287
  %v289 = vlaneseq
  %v290 = vshrl.u32 %v289, 7
  %v291 = vsub.s32 3, %v290
  %v292 = vrot.slane %v275, %v291
  %v298 = vcombine.high %v50, %v50
  %v300 = vunpack.c.l.s4 1983009808
  %v301 = vunpack.c.0.s8 %v300
  %v302 = vlaneseq
  %v303 = vshrl.u32 %v302, 7
  %v304 = vsub.s32 %v301, %v303
  %v305 = vrot.slane %v50, %v304
  %v307 = vunpack.c.l.s4 1983009808
  %v308 = vunpack.c.0.s8 %v307
  %v309 = vlaneseq
  %v310 = vshrl.u32 %v309, 7
  %v311 = vsub.s32 %v308, %v310
  %v312 = vrot.slane %v298, %v311
  %v313 = vcombine.high %v305, %v305
  %v314 = vcombine.high %v312, %v312
  %vm318 = vcmask 523264
  %v319 = vsel %vm318, %v314, 0
  %321 = vmatprep.subr.mxu0 %v52
  %322 = vmatpush1.msra.mxu0 %v51
  %323 = vmatprep.subr.mxu0 %v56
  %324 = vmatpush1.msra.mxu0 %v55
  %325 = vmatprep.subr.mxu0 %v60
  %326 = vmatpush1.msra.mxu0 %v59
  %327 = vmatprep.subr.mxu0 %v64
  %328 = vmatpush1.msra.mxu0 %v63
  %329 = vmatprep.subr.mxu0 %v68
  %330 = vmatpush1.msra.mxu0 %v67
  %331 = vmatprep.subr.mxu0 %v72
  %332 = vmatpush1.msra.mxu0 %v71
  %333 = vmatprep.subr.mxu0 %v76
  %334 = vmatpush1.msra.mxu0 %v75
  %335 = vmatprep.subr.mxu0 %v80
  %336 = vmatpush1.msra.mxu0 %v79
  %337 = vmatprep.subr.mxu0 %v84
  %338 = vmatpush1.msra.mxu0 %v83
  %339 = vmatprep.subr.mxu0 %v88
  %340 = vmatpush1.msra.mxu0 %v87
  %341 = vmatprep.subr.mxu0 %v92
  %342 = vmatpush1.msra.mxu0 %v91
  %343 = vmatprep.subr.mxu0 %v96
  %344 = vmatpush1.msra.mxu0 %v95
  %345 = vmatprep.subr.mxu0 %v100
  %346 = vmatpush1.msra.mxu0 %v99
  %347 = vmatprep.subr.mxu0 %v104
  %348 = vmatpush1.msra.mxu0 %v103
  %349 = vmatprep.subr.mxu0 %v108
  %350 = vmatpush1.msra.mxu0 %v107
  %351 = vmatprep.subr.mxu0 %v112
  %352 = vmatpush1.msra.mxu0 %v111
  %353 = vmatprep.subr.mxu0 %v116
  %354 = vmatpush1.msra.mxu0 %v115
  %355 = vmatprep.subr.mxu0 %v120
  %356 = vmatpush1.msra.mxu0 %v119
  %357 = vmatprep.subr.mxu0 %v124
  %358 = vmatpush1.msra.mxu0 %v123
  %359 = vmatprep.subr.mxu0 %v128
  %360 = vmatpush1.msra.mxu0 %v127
  %361 = vmatprep.subr.mxu0 %v132
  %362 = vmatpush1.msra.mxu0 %v131
  %363 = vmatprep.subr.mxu0 %v136
  %364 = vmatpush1.msra.mxu0 %v135
  %365 = vmatprep.subr.mxu0 %v140
  %366 = vmatpush1.msra.mxu0 %v139
  %367 = vmatprep.subr.mxu0 %v144
  %368 = vmatpush1.msra.mxu0 %v143
  %369 = vmatprep.subr.mxu0 %v148
  %370 = vmatpush1.msra.mxu0 %v147
  %371 = vmatprep.subr.mxu0 %v152
  %372 = vmatpush1.msra.mxu0 %v151
  %373 = vmatprep.subr.mxu0 %v156
  %374 = vmatpush1.msra.mxu0 %v155
  %375 = vmatprep.subr.mxu0 %v160
  %376 = vmatpush1.msra.mxu0 %v159
  %377 = vmatprep.subr.mxu0 %v164
  %378 = vmatpush1.msra.mxu0 %v163
  %379 = vmatprep.subr.mxu0 %v168
  %380 = vmatpush1.msra.mxu0 %v167
  %381 = vmatprep.subr.mxu0 %v172
  %382 = vmatpush1.msra.mxu0 %v171
  %383 = vmatprep.subr.mxu0 %v176
  %384 = vmatpush1.msra.mxu0 %v175
  %385 = vmatprep.mubr.f32.mxu0 %v313
  %386 = vmatmul.mubr.f32.gmra.mrb[0].mxu0 %v305
  %v387 = vpop.f32.mrb[0].mxu0
  %v388 = vadd.f32 %v280, %v387
  %v389 = vpop.f32.mrb[0].mxu0
  %v390 = vadd.f32 %v284, %v389
  %391 = vdwg.mxu0
  %392 = vmatprep.subr.mxu0 %v180
  %393 = vmatpush1.msra.mxu0 %v179
  %394 = vmatprep.subr.mxu0 %v184
  %395 = vmatpush1.msra.mxu0 %v183
  %396 = vmatprep.subr.mxu0 %v188
  %397 = vmatpush1.msra.mxu0 %v187
  %398 = vmatprep.subr.mxu0 %v192
  %399 = vmatpush1.msra.mxu0 %v191
  %400 = vmatprep.subr.mxu0 %v196
  %401 = vmatpush1.msra.mxu0 %v195
  %402 = vmatprep.subr.mxu0 %v200
  %403 = vmatpush1.msra.mxu0 %v199
  %404 = vmatprep.subr.mxu0 %v204
  %405 = vmatpush1.msra.mxu0 %v203
  %406 = vmatprep.subr.mxu0 %v208
  %407 = vmatpush1.msra.mxu0 %v207
  %408 = vmatprep.subr.mxu0 %v212
  %409 = vmatpush1.msra.mxu0 %v211
  %410 = vmatprep.subr.mxu0 %v216
  %411 = vmatpush1.msra.mxu0 %v215
  %412 = vmatprep.subr.mxu0 %v220
  %413 = vmatpush1.msra.mxu0 %v219
  %414 = vmatprep.subr.mxu0 %v224
  %415 = vmatpush1.msra.mxu0 %v223
  %416 = vmatprep.subr.mxu0 %v228
  %417 = vmatpush1.msra.mxu0 %v227
  %418 = vmatprep.subr.mxu0 %v232
  %419 = vmatpush1.msra.mxu0 %v231
  %420 = vmatprep.subr.mxu0 %v236
  %421 = vmatpush1.msra.mxu0 %v235
  %422 = vmatprep.subr.mxu0 %v240
  %423 = vmatpush1.msra.mxu0 %v239
  %424 = vmatprep.subr.mxu0 %v244
  %425 = vmatpush1.msra.mxu0 %v243
  %426 = vmatprep.subr.mxu0 %v248
  %427 = vmatpush1.msra.mxu0 %v247
  %428 = vmatprep.subr.mxu0 %v252
  %429 = vmatpush1.msra.mxu0 %v251
  %430 = vmatprep.subr.mxu0 %v256
  %431 = vmatpush1.msra.mxu0 %v255
  %432 = vmatprep.subr.mxu0 %v260
  %433 = vmatpush1.msra.mxu0 %v259
  %434 = vmatprep.subr.mxu0 %v264
  %435 = vmatpush1.msra.mxu0 %v263
  %436 = vmatprep.subr.mxu0 %v268
  %437 = vmatpush1.msra.mxu0 %v267
  %438 = vmatprep.subr.mxu0 %v272
  %439 = vmatpush1.msra.mxu0 %v271
  %440 = vmatprep.subr.mxu0 0.0
  %441 = vmatpush1.msra.mxu0 0.0
  %442 = vmatprep.subr.mxu0 0.0
  %443 = vmatpush1.msra.mxu0 0.0
  %444 = vmatprep.subr.mxu0 0.0
  %445 = vmatpush1.msra.mxu0 0.0
  %446 = vmatprep.subr.mxu0 0.0
  %447 = vmatpush1.msra.mxu0 0.0
  %448 = vmatprep.subr.mxu0 0.0
  %449 = vmatpush1.msra.mxu0 0.0
  %450 = vmatprep.subr.mxu0 0.0
  %451 = vmatpush1.msra.mxu0 0.0
  %452 = vmatprep.subr.mxu0 0.0
  %453 = vmatpush1.msra.mxu0 0.0
  %454 = vmatprep.subr.mxu0 0.0
  %455 = vmatpush1.msra.mxu0 0.0
  %456 = vmatprep.mubr.f32.mxu0 %v319
  %457 = vmatmul.mubr.f32.gmra.mrb[0].mxu0 %v312
  %v458 = vpop.f32.mrb[0].mxu0
  %v459 = vadd.f32 %v388, %v458
  %v460 = vpop.f32.mrb[0].mxu0
  %v461 = vadd.f32 %v390, %v460
  %462 = vdwg.mxu0
  %463 = vmatprep.subr.mxu0 %v54
  %464 = vmatpush1.msra.mxu0 %v53
  %465 = vmatprep.subr.mxu0 %v58
  %466 = vmatpush1.msra.mxu0 %v57
  %467 = vmatprep.subr.mxu0 %v62
  %468 = vmatpush1.msra.mxu0 %v61
  %469 = vmatprep.subr.mxu0 %v66
  %470 = vmatpush1.msra.mxu0 %v65
  %471 = vmatprep.subr.mxu0 %v70
  %472 = vmatpush1.msra.mxu0 %v69
  %473 = vmatprep.subr.mxu0 %v74
  %474 = vmatpush1.msra.mxu0 %v73
  %475 = vmatprep.subr.mxu0 %v78
  %476 = vmatpush1.msra.mxu0 %v77
  %477 = vmatprep.subr.mxu0 %v82
  %478 = vmatpush1.msra.mxu0 %v81
  %479 = vmatprep.subr.mxu0 %v86
  %480 = vmatpush1.msra.mxu0 %v85
  %481 = vmatprep.subr.mxu0 %v90
  %482 = vmatpush1.msra.mxu0 %v89
  %483 = vmatprep.subr.mxu0 %v94
  %484 = vmatpush1.msra.mxu0 %v93
  %485 = vmatprep.subr.mxu0 %v98
  %486 = vmatpush1.msra.mxu0 %v97
  %487 = vmatprep.subr.mxu0 %v102
  %488 = vmatpush1.msra.mxu0 %v101
  %489 = vmatprep.subr.mxu0 %v106
  %490 = vmatpush1.msra.mxu0 %v105
  %491 = vmatprep.subr.mxu0 %v110
  %492 = vmatpush1.msra.mxu0 %v109
  %493 = vmatprep.subr.mxu0 %v114
  %494 = vmatpush1.msra.mxu0 %v113
  %495 = vmatprep.subr.mxu0 %v118
  %496 = vmatpush1.msra.mxu0 %v117
  %497 = vmatprep.subr.mxu0 %v122
  %498 = vmatpush1.msra.mxu0 %v121
  %499 = vmatprep.subr.mxu0 %v126
  %500 = vmatpush1.msra.mxu0 %v125
  %501 = vmatprep.subr.mxu0 %v130
  %502 = vmatpush1.msra.mxu0 %v129
  %503 = vmatprep.subr.mxu0 %v134
  %504 = vmatpush1.msra.mxu0 %v133
  %505 = vmatprep.subr.mxu0 %v138
  %506 = vmatpush1.msra.mxu0 %v137
  %507 = vmatprep.subr.mxu0 %v142
  %508 = vmatpush1.msra.mxu0 %v141
  %509 = vmatprep.subr.mxu0 %v146
  %510 = vmatpush1.msra.mxu0 %v145
  %511 = vmatprep.subr.mxu0 %v150
  %512 = vmatpush1.msra.mxu0 %v149
  %513 = vmatprep.subr.mxu0 %v154
  %514 = vmatpush1.msra.mxu0 %v153
  %515 = vmatprep.subr.mxu0 %v158
  %516 = vmatpush1.msra.mxu0 %v157
  %517 = vmatprep.subr.mxu0 %v162
  %518 = vmatpush1.msra.mxu0 %v161
  %519 = vmatprep.subr.mxu0 %v166
  %520 = vmatpush1.msra.mxu0 %v165
  %521 = vmatprep.subr.mxu0 %v170
  %522 = vmatpush1.msra.mxu0 %v169
  %523 = vmatprep.subr.mxu0 %v174
  %524 = vmatpush1.msra.mxu0 %v173
  %525 = vmatprep.subr.mxu0 %v178
  %526 = vmatpush1.msra.mxu0 %v177
  %527 = vmatprep.mubr.f32.mxu0 %v313
  %528 = vmatmul.mubr.f32.gmra.mrb[0].mxu0 %v305
  %v529 = vpop.f32.mrb[0].mxu0
  %v530 = vadd.f32 %v288, %v529
  %v531 = vpop.f32.mrb[0].mxu0
  %v532 = vadd.f32 %v292, %v531
  %533 = vdwg.mxu0
  %534 = vmatprep.subr.mxu0 %v182
  %535 = vmatpush1.msra.mxu0 %v181
  %536 = vmatprep.subr.mxu0 %v186
  %537 = vmatpush1.msra.mxu0 %v185
  %538 = vmatprep.subr.mxu0 %v190
  %539 = vmatpush1.msra.mxu0 %v189
  %540 = vmatprep.subr.mxu0 %v194
  %541 = vmatpush1.msra.mxu0 %v193
  %542 = vmatprep.subr.mxu0 %v198
  %543 = vmatpush1.msra.mxu0 %v197
  %544 = vmatprep.subr.mxu0 %v202
  %545 = vmatpush1.msra.mxu0 %v201
  %546 = vmatprep.subr.mxu0 %v206
  %547 = vmatpush1.msra.mxu0 %v205
  %548 = vmatprep.subr.mxu0 %v210
  %549 = vmatpush1.msra.mxu0 %v209
  %550 = vmatprep.subr.mxu0 %v214
  %551 = vmatpush1.msra.mxu0 %v213
  %552 = vmatprep.subr.mxu0 %v218
  %553 = vmatpush1.msra.mxu0 %v217
  %554 = vmatprep.subr.mxu0 %v222
  %555 = vmatpush1.msra.mxu0 %v221
  %556 = vmatprep.subr.mxu0 %v226
  %557 = vmatpush1.msra.mxu0 %v225
  %558 = vmatprep.subr.mxu0 %v230
  %559 = vmatpush1.msra.mxu0 %v229
  %560 = vmatprep.subr.mxu0 %v234
  %561 = vmatpush1.msra.mxu0 %v233
  %562 = vmatprep.subr.mxu0 %v238
  %563 = vmatpush1.msra.mxu0 %v237
  %564 = vmatprep.subr.mxu0 %v242
  %565 = vmatpush1.msra.mxu0 %v241
  %566 = vmatprep.subr.mxu0 %v246
  %567 = vmatpush1.msra.mxu0 %v245
  %568 = vmatprep.subr.mxu0 %v250
  %569 = vmatpush1.msra.mxu0 %v249
  %570 = vmatprep.subr.mxu0 %v254
  %571 = vmatpush1.msra.mxu0 %v253
  %572 = vmatprep.subr.mxu0 %v258
  %573 = vmatpush1.msra.mxu0 %v257
  %574 = vmatprep.subr.mxu0 %v262
  %575 = vmatpush1.msra.mxu0 %v261
  %576 = vmatprep.subr.mxu0 %v266
  %577 = vmatpush1.msra.mxu0 %v265
  %578 = vmatprep.subr.mxu0 %v270
  %579 = vmatpush1.msra.mxu0 %v269
  %580 = vmatprep.subr.mxu0 %v274
  %581 = vmatpush1.msra.mxu0 %v273
  %582 = vmatprep.subr.mxu0 0.0
  %583 = vmatpush1.msra.mxu0 0.0
  %584 = vmatprep.subr.mxu0 0.0
  %585 = vmatpush1.msra.mxu0 0.0
  %586 = vmatprep.subr.mxu0 0.0
  %587 = vmatpush1.msra.mxu0 0.0
  %588 = vmatprep.subr.mxu0 0.0
  %589 = vmatpush1.msra.mxu0 0.0
  %590 = vmatprep.subr.mxu0 0.0
  %591 = vmatpush1.msra.mxu0 0.0
  %592 = vmatprep.subr.mxu0 0.0
  %593 = vmatpush1.msra.mxu0 0.0
  %594 = vmatprep.subr.mxu0 0.0
  %595 = vmatpush1.msra.mxu0 0.0
  %596 = vmatprep.subr.mxu0 0.0
  %597 = vmatpush1.msra.mxu0 0.0
  %598 = vmatprep.mubr.f32.mxu0 %v319
  %599 = vmatmul.mubr.f32.gmra.mrb[0].mxu0 %v312
  %v600 = vpop.f32.mrb[0].mxu0
  %v601 = vadd.f32 %v530, %v600
  %v602 = vpop.f32.mrb[0].mxu0
  %v603 = vadd.f32 %v532, %v602
  %604 = vdwg.mxu0
  %v605 = vmax.f32 %v459, 0.0
  %v606 = vmax.f32 %v461, 0.0
  %v607 = vmax.f32 %v601, 0.0
  %v608 = vmax.f32 %v603, 0.0
  %v609 = vld [vmem:[%s5] sm:$0xff]
  %v610 = vld [vmem:[%s5 + $0x8] sm:$0xff]
  %v611 = vld [vmem:[%s5 + $0x10] sm:$0xff]
  %v612 = vld [vmem:[%s5 + $0x18] sm:$0xff]
  %v613 = vld [vmem:[%s5 + $0x20] sm:$0xff]
  %v614 = vld [vmem:[%s5 + $0x28] sm:$0xff]
  %v615 = vld [vmem:[%s5 + $0x30] sm:$0xff]
  %v616 = vld [vmem:[%s5 + $0x38] sm:$0xff]
  %v617 = vld [vmem:[%s5 + $0x40] sm:$0xff]
  %v618 = vld [vmem:[%s5 + $0x48] sm:$0xff]
  %v619 = vld [vmem:[%s5 + $0x50] sm:$0xff]
  %v620 = vld [vmem:[%s5 + $0x58] sm:$0xff]
  %v621 = vld [vmem:[%s5 + $0x60] sm:$0xff]
  %v622 = vld [vmem:[%s5 + $0x68] sm:$0xff]
  %v623 = vld [vmem:[%s5 + $0x70] sm:$0xff]
  %v624 = vld [vmem:[%s5 + $0x78] sm:$0xff]
  %v625 = vld [vmem:[%s5 + $0x80] sm:$0xff]
  %v626 = vld [vmem:[%s5 + $0x88] sm:$0xff]
  %v627 = vld [vmem:[%s5 + $0x90] sm:$0xff]
  %v628 = vld [vmem:[%s5 + $0x98] sm:$0xff]
  %v629 = vld [vmem:[%s5 + $0xa0] sm:$0xff]
  %v630 = vld [vmem:[%s5 + $0xa8] sm:$0xff]
  %v631 = vld [vmem:[%s5 + $0xb0] sm:$0xff]
  %v632 = vld [vmem:[%s5 + $0xb8] sm:$0xff]
  %v633 = vld [vmem:[%s5 + $0xc0] sm:$0xff]
  %v634 = vld [vmem:[%s5 + $0xc8] sm:$0xff]
  %v635 = vld [vmem:[%s5 + $0xd0] sm:$0xff]
  %v636 = vld [vmem:[%s5 + $0xd8] sm:$0xff]
  %v637 = vld [vmem:[%s5 + $0xe0] sm:$0xff]
  %v638 = vld [vmem:[%s5 + $0xe8] sm:$0xff]
  %v639 = vld [vmem:[%s5 + $0xf0] sm:$0xff]
  %v640 = vld [vmem:[%s5 + $0xf8] sm:$0xff]
  %v641 = vld [vmem:[%s5 + $0x100] sm:$0xff]
  %v642 = vld [vmem:[%s5 + $0x108] sm:$0xff]
  %v643 = vld [vmem:[%s5 + $0x110] sm:$0xff]
  %v644 = vld [vmem:[%s5 + $0x118] sm:$0xff]
  %v645 = vld [vmem:[%s5 + $0x120] sm:$0xff]
  %v646 = vld [vmem:[%s5 + $0x128] sm:$0xff]
  %v647 = vld [vmem:[%s5 + $0x130] sm:$0xff]
  %v648 = vld [vmem:[%s5 + $0x138] sm:$0xff]
  %v649 = vld [vmem:[%s5 + $0x140] sm:$0xff]
  %v650 = vld [vmem:[%s5 + $0x148] sm:$0xff]
  %v651 = vld [vmem:[%s5 + $0x150] sm:$0xff]
  %v652 = vld [vmem:[%s5 + $0x158] sm:$0xff]
  %v653 = vld [vmem:[%s5 + $0x160] sm:$0xff]
  %v654 = vld [vmem:[%s5 + $0x168] sm:$0xff]
  %v655 = vld [vmem:[%s5 + $0x170] sm:$0xff]
  %v656 = vld [vmem:[%s5 + $0x178] sm:$0xff]
  %v657 = vld [vmem:[%s5 + $0x180] sm:$0xff]
  %v658 = vld [vmem:[%s5 + $0x188] sm:$0xff]
  %v659 = vld [vmem:[%s5 + $0x190] sm:$0xff]
  %v660 = vld [vmem:[%s5 + $0x198] sm:$0xff]
  %v661 = vld [vmem:[%s5 + $0x1a0] sm:$0xff]
  %v662 = vld [vmem:[%s5 + $0x1a8] sm:$0xff]
  %v663 = vld [vmem:[%s5 + $0x1b0] sm:$0xff]
  %v664 = vld [vmem:[%s5 + $0x1b8] sm:$0xff]
  %v665 = vld [vmem:[%s5 + $0x1c0] sm:$0xff]
  %v666 = vld [vmem:[%s5 + $0x1c8] sm:$0xff]
  %v667 = vld [vmem:[%s5 + $0x1d0] sm:$0xff]
  %v668 = vld [vmem:[%s5 + $0x1d8] sm:$0xff]
  %v669 = vld [vmem:[%s5 + $0x1e0] sm:$0xff]
  %v670 = vld [vmem:[%s5 + $0x1e8] sm:$0xff]
  %v671 = vld [vmem:[%s5 + $0x1f0] sm:$0xff]
  %v672 = vld [vmem:[%s5 + $0x1f8] sm:$0xff]
  %v673 = vld [vmem:[%s5 + $0x200] sm:$0xff]
  %v674 = vld [vmem:[%s5 + $0x208] sm:$0xff]
  %v675 = vld [vmem:[%s5 + $0x210] sm:$0xff]
  %v676 = vld [vmem:[%s5 + $0x218] sm:$0xff]
  %v677 = vld [vmem:[%s5 + $0x220] sm:$0xff]
  %v678 = vld [vmem:[%s5 + $0x228] sm:$0xff]
  %v679 = vld [vmem:[%s5 + $0x230] sm:$0xff]
  %v680 = vld [vmem:[%s5 + $0x238] sm:$0xff]
  %v681 = vld [vmem:[%s5 + $0x240] sm:$0xff]
  %v682 = vld [vmem:[%s5 + $0x248] sm:$0xff]
  %v683 = vld [vmem:[%s5 + $0x250] sm:$0xff]
  %v684 = vld [vmem:[%s5 + $0x258] sm:$0xff]
  %v685 = vld [vmem:[%s5 + $0x260] sm:$0xff]
  %v686 = vld [vmem:[%s5 + $0x268] sm:$0xff]
  %v687 = vld [vmem:[%s5 + $0x270] sm:$0xff]
  %v688 = vld [vmem:[%s5 + $0x278] sm:$0xff]
  %v689 = vld [vmem:[%s5 + $0x280] sm:$0xff]
  %v690 = vld [vmem:[%s5 + $0x288] sm:$0xff]
  %v691 = vld [vmem:[%s5 + $0x290] sm:$0xff]
  %v692 = vld [vmem:[%s5 + $0x298] sm:$0xff]
  %v693 = vld [vmem:[%s5 + $0x2a0] sm:$0xff]
  %v694 = vld [vmem:[%s5 + $0x2a8] sm:$0xff]
  %v695 = vld [vmem:[%s5 + $0x2b0] sm:$0xff]
  %v696 = vld [vmem:[%s5 + $0x2b8] sm:$0xff]
  %v697 = vld [vmem:[%s5 + $0x2c0] sm:$0xff]
  %v698 = vld [vmem:[%s5 + $0x2c8] sm:$0xff]
  %v699 = vld [vmem:[%s5 + $0x2d0] sm:$0xff]
  %v700 = vld [vmem:[%s5 + $0x2d8] sm:$0xff]
  %v701 = vld [vmem:[%s5 + $0x2e0] sm:$0xff]
  %v702 = vld [vmem:[%s5 + $0x2e8] sm:$0xff]
  %v703 = vld [vmem:[%s5 + $0x2f0] sm:$0xff]
  %v704 = vld [vmem:[%s5 + $0x2f8] sm:$0xff]
  %v705 = vld [vmem:[%s5 + $0x300] sm:$0xff]
  %v706 = vld [vmem:[%s5 + $0x308] sm:$0xff]
  %v707 = vld [vmem:[%s5 + $0x310] sm:$0xff]
  %v708 = vld [vmem:[%s5 + $0x318] sm:$0xff]
  %v709 = vld [vmem:[%s5 + $0x320] sm:$0xff]
  %v710 = vld [vmem:[%s5 + $0x328] sm:$0xff]
  %v711 = vld [vmem:[%s5 + $0x330] sm:$0xff]
  %v712 = vld [vmem:[%s5 + $0x338] sm:$0xff]
  %v713 = vld [vmem:[%s5 + $0x340] sm:$0xff]
  %v714 = vld [vmem:[%s5 + $0x348] sm:$0xff]
  %v715 = vld [vmem:[%s5 + $0x350] sm:$0xff]
  %v716 = vld [vmem:[%s5 + $0x358] sm:$0xff]
  %v717 = vld [vmem:[%s5 + $0x360] sm:$0xff]
  %v718 = vld [vmem:[%s5 + $0x368] sm:$0xff]
  %v719 = vld [vmem:[%s5 + $0x370] sm:$0xff]
  %v720 = vld [vmem:[%s5 + $0x378] sm:$0xff]
  %v721 = vld [vmem:[%s5 + $0x380] sm:$0xff]
  %v722 = vld [vmem:[%s5 + $0x388] sm:$0xff]
  %v723 = vld [vmem:[%s5 + $0x390] sm:$0xff]
  %v724 = vld [vmem:[%s5 + $0x398] sm:$0xff]
  %v725 = vld [vmem:[%s5 + $0x3a0] sm:$0xff]
  %v726 = vld [vmem:[%s5 + $0x3a8] sm:$0xff]
  %v727 = vld [vmem:[%s5 + $0x3b0] sm:$0xff]
  %v728 = vld [vmem:[%s5 + $0x3b8] sm:$0xff]
  %v729 = vld [vmem:[%s5 + $0x3c0] sm:$0xff]
  %v730 = vld [vmem:[%s5 + $0x3c8] sm:$0xff]
  %v731 = vld [vmem:[%s5 + $0x3d0] sm:$0xff]
  %v732 = vld [vmem:[%s5 + $0x3d8] sm:$0xff]
  %v733 = vld [vmem:[%s5 + $0x3e0] sm:$0xff]
  %v734 = vld [vmem:[%s5 + $0x3e8] sm:$0xff]
  %v735 = vld [vmem:[%s5 + $0x3f0] sm:$0xff]
  %v736 = vld [vmem:[%s5 + $0x3f8] sm:$0xff]
  %v737 = vld [vmem:[%s5 + $0x400] sm:$0xff]
  %v738 = vld [vmem:[%s5 + $0x408] sm:$0xff]
  %v739 = vld [vmem:[%s5 + $0x410] sm:$0xff]
  %v740 = vld [vmem:[%s5 + $0x418] sm:$0xff]
  %v741 = vld [vmem:[%s5 + $0x420] sm:$0xff]
  %v742 = vld [vmem:[%s5 + $0x428] sm:$0xff]
  %v743 = vld [vmem:[%s5 + $0x430] sm:$0xff]
  %v744 = vld [vmem:[%s5 + $0x438] sm:$0xff]
  %v745 = vld [vmem:[%s5 + $0x440] sm:$0xff]
  %v746 = vld [vmem:[%s5 + $0x448] sm:$0xff]
  %v747 = vld [vmem:[%s5 + $0x450] sm:$0xff]
  %v748 = vld [vmem:[%s5 + $0x458] sm:$0xff]
  %v749 = vld [vmem:[%s5 + $0x460] sm:$0xff]
  %v750 = vld [vmem:[%s5 + $0x468] sm:$0xff]
  %v751 = vld [vmem:[%s5 + $0x470] sm:$0xff]
  %v752 = vld [vmem:[%s5 + $0x478] sm:$0xff]
  %v753 = vld [vmem:[%s5 + $0x480] sm:$0xff]
  %v754 = vld [vmem:[%s5 + $0x488] sm:$0xff]
  %v755 = vld [vmem:[%s5 + $0x490] sm:$0xff]
  %v756 = vld [vmem:[%s6] sm:$0x7]
  %v758 = vlaneseq
  %v759 = vshrl.u32 %v758, 7
  %v760 = vsub.s32 0, %v759
  %v761 = vrot.slane %v756, %v760
  %v762 = vlaneseq
  %v763 = vshrl.u32 %v762, 7
  %v764 = vsub.s32 1, %v763
  %v765 = vrot.slane %v756, %v764
  %v766 = vlaneseq
  %v767 = vshrl.u32 %v766, 7
  %v768 = vsub.s32 2, %v767
  %v769 = vrot.slane %v756, %v768
  %vm773 = vcmask 64512
  %v775 = vsel %vm773, %v608, 0
  %777 = vmatprep.subr.mxu0 %v610
  %778 = vmatpush1.msra.mxu0 %v609
  %779 = vmatprep.subr.mxu0 %v613
  %780 = vmatpush1.msra.mxu0 %v612
  %781 = vmatprep.subr.mxu0 %v616
  %782 = vmatpush1.msra.mxu0 %v615
  %783 = vmatprep.subr.mxu0 %v619
  %784 = vmatpush1.msra.mxu0 %v618
  %785 = vmatprep.subr.mxu0 %v622
  %786 = vmatpush1.msra.mxu0 %v621
  %787 = vmatprep.subr.mxu0 %v625
  %788 = vmatpush1.msra.mxu0 %v624
  %789 = vmatprep.subr.mxu0 %v628
  %790 = vmatpush1.msra.mxu0 %v627
  %791 = vmatprep.subr.mxu0 %v631
  %792 = vmatpush1.msra.mxu0 %v630
  %793 = vmatprep.subr.mxu0 %v634
  %794 = vmatpush1.msra.mxu0 %v633
  %795 = vmatprep.subr.mxu0 %v637
  %796 = vmatpush1.msra.mxu0 %v636
  %797 = vmatprep.subr.mxu0 %v640
  %798 = vmatpush1.msra.mxu0 %v639
  %799 = vmatprep.subr.mxu0 %v643
  %800 = vmatpush1.msra.mxu0 %v642
  %801 = vmatprep.subr.mxu0 %v646
  %802 = vmatpush1.msra.mxu0 %v645
  %803 = vmatprep.subr.mxu0 %v649
  %804 = vmatpush1.msra.mxu0 %v648
  %805 = vmatprep.subr.mxu0 %v652
  %806 = vmatpush1.msra.mxu0 %v651
  %807 = vmatprep.subr.mxu0 %v655
  %808 = vmatpush1.msra.mxu0 %v654
  %809 = vmatprep.subr.mxu0 %v658
  %810 = vmatpush1.msra.mxu0 %v657
  %811 = vmatprep.subr.mxu0 %v661
  %812 = vmatpush1.msra.mxu0 %v660
  %813 = vmatprep.subr.mxu0 %v664
  %814 = vmatpush1.msra.mxu0 %v663
  %815 = vmatprep.subr.mxu0 %v667
  %816 = vmatpush1.msra.mxu0 %v666
  %817 = vmatprep.subr.mxu0 %v670
  %818 = vmatpush1.msra.mxu0 %v669
  %819 = vmatprep.subr.mxu0 %v673
  %820 = vmatpush1.msra.mxu0 %v672
  %821 = vmatprep.subr.mxu0 %v676
  %822 = vmatpush1.msra.mxu0 %v675
  %823 = vmatprep.subr.mxu0 %v679
  %824 = vmatpush1.msra.mxu0 %v678
  %825 = vmatprep.subr.mxu0 %v682
  %826 = vmatpush1.msra.mxu0 %v681
  %827 = vmatprep.subr.mxu0 %v685
  %828 = vmatpush1.msra.mxu0 %v684
  %829 = vmatprep.subr.mxu0 %v688
  %830 = vmatpush1.msra.mxu0 %v687
  %831 = vmatprep.subr.mxu0 %v691
  %832 = vmatpush1.msra.mxu0 %v690
  %833 = vmatprep.subr.mxu0 %v694
  %834 = vmatpush1.msra.mxu0 %v693
  %835 = vmatprep.subr.mxu0 %v697
  %836 = vmatpush1.msra.mxu0 %v696
  %837 = vmatprep.subr.mxu0 %v700
  %838 = vmatpush1.msra.mxu0 %v699
  %839 = vmatprep.subr.mxu0 %v703
  %840 = vmatpush1.msra.mxu0 %v702
  %841 = vmatprep.mubr.f32.mxu0 %v606
  %842 = vmatmul.mubr.f32.gmra.mrb[0].mxu0 %v605
  %v843 = vpop.f32.mrb[0].mxu0
  %v844 = vadd.f32 %v761, %v843
  %v845 = vpop.f32.mrb[0].mxu0
  %v846 = vadd.f32 %v765, %v845
  %847 = vdwg.mxu0
  %848 = vmatprep.subr.mxu0 %v706
  %849 = vmatpush1.msra.mxu0 %v705
  %850 = vmatprep.subr.mxu0 %v709
  %851 = vmatpush1.msra.mxu0 %v708
  %852 = vmatprep.subr.mxu0 %v712
  %853 = vmatpush1.msra.mxu0 %v711
  %854 = vmatprep.subr.mxu0 %v715
  %855 = vmatpush1.msra.mxu0 %v714
  %856 = vmatprep.subr.mxu0 %v718
  %857 = vmatpush1.msra.mxu0 %v717
  %858 = vmatprep.subr.mxu0 %v721
  %859 = vmatpush1.msra.mxu0 %v720
  %860 = vmatprep.subr.mxu0 %v724
  %861 = vmatpush1.msra.mxu0 %v723
  %862 = vmatprep.subr.mxu0 %v727
  %863 = vmatpush1.msra.mxu0 %v726
  %864 = vmatprep.subr.mxu0 %v730
  %865 = vmatpush1.msra.mxu0 %v729
  %866 = vmatprep.subr.mxu0 %v733
  %867 = vmatpush1.msra.mxu0 %v732
  %868 = vmatprep.subr.mxu0 %v736
  %869 = vmatpush1.msra.mxu0 %v735
  %870 = vmatprep.subr.mxu0 %v739
  %871 = vmatpush1.msra.mxu0 %v738
  %872 = vmatprep.subr.mxu0 %v742
  %873 = vmatpush1.msra.mxu0 %v741
  %874 = vmatprep.subr.mxu0 %v745
  %875 = vmatpush1.msra.mxu0 %v744
  %876 = vmatprep.subr.mxu0 %v748
  %877 = vmatpush1.msra.mxu0 %v747
  %878 = vmatprep.subr.mxu0 %v751
  %879 = vmatpush1.msra.mxu0 %v750
  %880 = vmatprep.subr.mxu0 %v754
  %881 = vmatpush1.msra.mxu0 %v753
  %882 = vmatprep.subr.mxu0 0.0
  %883 = vmatpush1.msra.mxu0 0.0
  %884 = vmatprep.subr.mxu0 0.0
  %885 = vmatpush1.msra.mxu0 0.0
  %886 = vmatprep.subr.mxu0 0.0
  %887 = vmatpush1.msra.mxu0 0.0
  %888 = vmatprep.subr.mxu0 0.0
  %889 = vmatpush1.msra.mxu0 0.0
  %890 = vmatprep.subr.mxu0 0.0
  %891 = vmatpush1.msra.mxu0 0.0
  %892 = vmatprep.subr.mxu0 0.0
  %893 = vmatpush1.msra.mxu0 0.0
  %894 = vmatprep.subr.mxu0 0.0
  %895 = vmatpush1.msra.mxu0 0.0
  %896 = vmatprep.subr.mxu0 0.0
  %897 = vmatpush1.msra.mxu0 0.0
  %898 = vmatprep.subr.mxu0 0.0
  %899 = vmatpush1.msra.mxu0 0.0
  %900 = vmatprep.subr.mxu0 0.0
  %901 = vmatpush1.msra.mxu0 0.0
  %902 = vmatprep.subr.mxu0 0.0
  %903 = vmatpush1.msra.mxu0 0.0
  %904 = vmatprep.subr.mxu0 0.0
  %905 = vmatpush1.msra.mxu0 0.0
  %906 = vmatprep.subr.mxu0 0.0
  %907 = vmatpush1.msra.mxu0 0.0
  %908 = vmatprep.subr.mxu0 0.0
  %909 = vmatpush1.msra.mxu0 0.0
  %910 = vmatprep.subr.mxu0 0.0
  %911 = vmatpush1.msra.mxu0 0.0
  %912 = vmatprep.mubr.f32.mxu0 %v775
  %913 = vmatmul.mubr.f32.gmra.mrb[0].mxu0 %v607
  %v914 = vpop.f32.mrb[0].mxu0
  %v915 = vadd.f32 %v844, %v914
  %v916 = vpop.f32.mrb[0].mxu0
  %v917 = vadd.f32 %v846, %v916
  %918 = vdwg.mxu0
  %919 = vmatprep.subr.mxu0 0.0
  %920 = vmatpush1.msra.mxu0 %v611
  %921 = vmatprep.subr.mxu0 0.0
  %922 = vmatpush1.msra.mxu0 %v614
  %923 = vmatprep.subr.mxu0 0.0
  %924 = vmatpush1.msra.mxu0 %v617
  %925 = vmatprep.subr.mxu0 0.0
  %926 = vmatpush1.msra.mxu0 %v620
  %927 = vmatprep.subr.mxu0 0.0
  %928 = vmatpush1.msra.mxu0 %v623
  %929 = vmatprep.subr.mxu0 0.0
  %930 = vmatpush1.msra.mxu0 %v626
  %931 = vmatprep.subr.mxu0 0.0
  %932 = vmatpush1.msra.mxu0 %v629
  %933 = vmatprep.subr.mxu0 0.0
  %934 = vmatpush1.msra.mxu0 %v632
  %935 = vmatprep.subr.mxu0 0.0
  %936 = vmatpush1.msra.mxu0 %v635
  %937 = vmatprep.subr.mxu0 0.0
  %938 = vmatpush1.msra.mxu0 %v638
  %939 = vmatprep.subr.mxu0 0.0
  %940 = vmatpush1.msra.mxu0 %v641
  %941 = vmatprep.subr.mxu0 0.0
  %942 = vmatpush1.msra.mxu0 %v644
  %943 = vmatprep.subr.mxu0 0.0
  %944 = vmatpush1.msra.mxu0 %v647
  %945 = vmatprep.subr.mxu0 0.0
  %946 = vmatpush1.msra.mxu0 %v650
  %947 = vmatprep.subr.mxu0 0.0
  %948 = vmatpush1.msra.mxu0 %v653
  %949 = vmatprep.subr.mxu0 0.0
  %950 = vmatpush1.msra.mxu0 %v656
  %951 = vmatprep.subr.mxu0 0.0
  %952 = vmatpush1.msra.mxu0 %v659
  %953 = vmatprep.subr.mxu0 0.0
  %954 = vmatpush1.msra.mxu0 %v662
  %955 = vmatprep.subr.mxu0 0.0
  %956 = vmatpush1.msra.mxu0 %v665
  %957 = vmatprep.subr.mxu0 0.0
  %958 = vmatpush1.msra.mxu0 %v668
  %959 = vmatprep.subr.mxu0 0.0
  %960 = vmatpush1.msra.mxu0 %v671
  %961 = vmatprep.subr.mxu0 0.0
  %962 = vmatpush1.msra.mxu0 %v674
  %963 = vmatprep.subr.mxu0 0.0
  %964 = vmatpush1.msra.mxu0 %v677
  %965 = vmatprep.subr.mxu0 0.0
  %966 = vmatpush1.msra.mxu0 %v680
  %967 = vmatprep.subr.mxu0 0.0
  %968 = vmatpush1.msra.mxu0 %v683
  %969 = vmatprep.subr.mxu0 0.0
  %970 = vmatpush1.msra.mxu0 %v686
  %971 = vmatprep.subr.mxu0 0.0
  %972 = vmatpush1.msra.mxu0 %v689
  %973 = vmatprep.subr.mxu0 0.0
  %974 = vmatpush1.msra.mxu0 %v692
  %975 = vmatprep.subr.mxu0 0.0
  %976 = vmatpush1.msra.mxu0 %v695
  %977 = vmatprep.subr.mxu0 0.0
  %978 = vmatpush1.msra.mxu0 %v698
  %979 = vmatprep.subr.mxu0 0.0
  %980 = vmatpush1.msra.mxu0 %v701
  %981 = vmatprep.subr.mxu0 0.0
  %982 = vmatpush1.msra.mxu0 %v704
  %983 = vmatprep.mubr.f32.mxu0 %v606
  %984 = vmatmul.mubr.f32.gmra.mrb[0].mxu0 %v605
  %v985 = vpop.f32.mrb[0].mxu0
  %v986 = vadd.f32 %v769, %v985
  %v987 = vpop.f32.mrb[0].mxu0
  %988 = vdwg.mxu0
  %989 = vmatprep.subr.mxu0 0.0
  %990 = vmatpush1.msra.mxu0 %v707
  %991 = vmatprep.subr.mxu0 0.0
  %992 = vmatpush1.msra.mxu0 %v710
  %993 = vmatprep.subr.mxu0 0.0
  %994 = vmatpush1.msra.mxu0 %v713
  %995 = vmatprep.subr.mxu0 0.0
  %996 = vmatpush1.msra.mxu0 %v716
  %997 = vmatprep.subr.mxu0 0.0
  %998 = vmatpush1.msra.mxu0 %v719
  %999 = vmatprep.subr.mxu0 0.0
  %1000 = vmatpush1.msra.mxu0 %v722
  %1001 = vmatprep.subr.mxu0 0.0
  %1002 = vmatpush1.msra.mxu0 %v725
  %1003 = vmatprep.subr.mxu0 0.0
  %1004 = vmatpush1.msra.mxu0 %v728
  %1005 = vmatprep.subr.mxu0 0.0
  %1006 = vmatpush1.msra.mxu0 %v731
  %1007 = vmatprep.subr.mxu0 0.0
  %1008 = vmatpush1.msra.mxu0 %v734
  %1009 = vmatprep.subr.mxu0 0.0
  %1010 = vmatpush1.msra.mxu0 %v737
  %1011 = vmatprep.subr.mxu0 0.0
  %1012 = vmatpush1.msra.mxu0 %v740
  %1013 = vmatprep.subr.mxu0 0.0
  %1014 = vmatpush1.msra.mxu0 %v743
  %1015 = vmatprep.subr.mxu0 0.0
  %1016 = vmatpush1.msra.mxu0 %v746
  %1017 = vmatprep.subr.mxu0 0.0
  %1018 = vmatpush1.msra.mxu0 %v749
  %1019 = vmatprep.subr.mxu0 0.0
  %1020 = vmatpush1.msra.mxu0 %v752
  %1021 = vmatprep.subr.mxu0 0.0
  %1022 = vmatpush1.msra.mxu0 %v755
  %1023 = vmatprep.subr.mxu0 0.0
  %1024 = vmatpush1.msra.mxu0 0.0
  %1025 = vmatprep.subr.mxu0 0.0
  %1026 = vmatpush1.msra.mxu0 0.0
  %1027 = vmatprep.subr.mxu0 0.0
  %1028 = vmatpush1.msra.mxu0 0.0
  %1029 = vmatprep.subr.mxu0 0.0
  %1030 = vmatpush1.msra.mxu0 0.0
  %1031 = vmatprep.subr.mxu0 0.0
  %1032 = vmatpush1.msra.mxu0 0.0
  %1033 = vmatprep.subr.mxu0 0.0
  %1034 = vmatpush1.msra.mxu0 0.0
  %1035 = vmatprep.subr.mxu0 0.0
  %1036 = vmatpush1.msra.mxu0 0.0
  %1037 = vmatprep.subr.mxu0 0.0
  %1038 = vmatpush1.msra.mxu0 0.0
  %1039 = vmatprep.subr.mxu0 0.0
  %1040 = vmatpush1.msra.mxu0 0.0
  %1041 = vmatprep.subr.mxu0 0.0
  %1042 = vmatpush1.msra.mxu0 0.0
  %1043 = vmatprep.subr.mxu0 0.0
  %1044 = vmatpush1.msra.mxu0 0.0
  %1045 = vmatprep.subr.mxu0 0.0
  %1046 = vmatpush1.msra.mxu0 0.0
  %1047 = vmatprep.subr.mxu0 0.0
  %1048 = vmatpush1.msra.mxu0 0.0
  %1049 = vmatprep.subr.mxu0 0.0
  %1050 = vmatpush1.msra.mxu0 0.0
  %1051 = vmatprep.subr.mxu0 0.0
  %1052 = vmatpush1.msra.mxu0 0.0
  %1053 = vmatprep.mubr.f32.mxu0 %v775
  %1054 = vmatmul.mubr.f32.gmra.mrb[0].mxu0 %v607
  %v1055 = vpop.f32.mrb[0].mxu0
  %v1056 = vadd.f32 %v986, %v1055
  %v1057 = vpop.f32.mrb[0].mxu0
  %1058 = vdwg.mxu0
  %v1059 = vmax.f32 %v915, 0.0
  %v1060 = vmax.f32 %v917, 0.0
  %v1061 = vmax.f32 %v1056, 0.0
  %v1062 = vld [vmem:[%s7] sm:$0xff]
  %v1063 = vld [vmem:[%s7 + $0x8] sm:$0xff]
  %v1064 = vld [vmem:[%s7 + $0x10] sm:$0xff]
  %v1065 = vld [vmem:[%s7 + $0x18] sm:$0xff]
  %v1066 = vld [vmem:[%s7 + $0x20] sm:$0xff]
  %v1067 = vld [vmem:[%s7 + $0x28] sm:$0xff]
  %v1068 = vld [vmem:[%s7 + $0x30] sm:$0xff]
  %v1069 = vld [vmem:[%s7 + $0x38] sm:$0xff]
  %v1070 = vld [vmem:[%s7 + $0x40] sm:$0xff]
  %v1071 = vld [vmem:[%s7 + $0x48] sm:$0xff]
  %v1072 = vld [vmem:[%s7 + $0x50] sm:$0xff]
  %v1073 = vld [vmem:[%s7 + $0x58] sm:$0xff]
  %v1074 = vld [vmem:[%s7 + $0x60] sm:$0xff]
  %v1075 = vld [vmem:[%s7 + $0x68] sm:$0xff]
  %v1076 = vld [vmem:[%s7 + $0x70] sm:$0xff]
  %v1077 = vld [vmem:[%s7 + $0x78] sm:$0xff]
  %v1078 = vld [vmem:[%s7 + $0x80] sm:$0xff]
  %v1079 = vld [vmem:[%s7 + $0x88] sm:$0xff]
  %v1080 = vld [vmem:[%s7 + $0x90] sm:$0xff]
  %v1081 = vld [vmem:[%s7 + $0x98] sm:$0xff]
  %v1082 = vld [vmem:[%s7 + $0xa0] sm:$0xff]
  %v1083 = vld [vmem:[%s7 + $0xa8] sm:$0xff]
  %v1084 = vld [vmem:[%s7 + $0xb0] sm:$0xff]
  %v1085 = vld [vmem:[%s7 + $0xb8] sm:$0xff]
  %v1086 = vld [vmem:[%s7 + $0xc0] sm:$0xff]
  %v1087 = vld [vmem:[%s7 + $0xc8] sm:$0xff]
  %v1088 = vld [vmem:[%s7 + $0xd0] sm:$0xff]
  %v1089 = vld [vmem:[%s7 + $0xd8] sm:$0xff]
  %v1090 = vld [vmem:[%s7 + $0xe0] sm:$0xff]
  %v1091 = vld [vmem:[%s7 + $0xe8] sm:$0xff]
  %v1092 = vld [vmem:[%s7 + $0xf0] sm:$0xff]
  %v1093 = vld [vmem:[%s7 + $0xf8] sm:$0xff]
  %v1094 = vld [vmem:[%s7 + $0x100] sm:$0xff]
  %v1095 = vld [vmem:[%s7 + $0x108] sm:$0xff]
  %v1096 = vld [vmem:[%s7 + $0x110] sm:$0xff]
  %v1097 = vld [vmem:[%s1] sm:$0x3]
  %v1098 = vld [vmem:[%s8] sm:$0xff]
  %v1100 = vsel %vm773, %v1097, 0
  %1102 = vmatprep.subr.mxu0 0.0
  %1103 = vmatpush1.msra.mxu0 %v1098
  %1104 = vmatprep.subr.mxu0 0.0
  %1105 = vmatpush1.msra.mxu0 0.0
  %1106 = vmatprep.subr.mxu0 0.0
  %1107 = vmatpush1.msra.mxu0 0.0
  %1108 = vmatprep.subr.mxu0 0.0
  %1109 = vmatpush1.msra.mxu0 0.0
  %1110 = vmatprep.subr.mxu0 0.0
  %1111 = vmatpush1.msra.mxu0 0.0
  %1112 = vmatprep.subr.mxu0 0.0
  %1113 = vmatpush1.msra.mxu0 0.0
  %1114 = vmatprep.subr.mxu0 0.0
  %1115 = vmatpush1.msra.mxu0 0.0
  %1116 = vmatprep.subr.mxu0 0.0
  %1117 = vmatpush1.msra.mxu0 0.0
  %1118 = vmatprep.subr.mxu0 0.0
  %1119 = vmatpush1.msra.mxu0 0.0
  %1120 = vmatprep.subr.mxu0 0.0
  %1121 = vmatpush1.msra.mxu0 0.0
  %1122 = vmatprep.subr.mxu0 0.0
  %1123 = vmatpush1.msra.mxu0 0.0
  %1124 = vmatprep.subr.mxu0 0.0
  %1125 = vmatpush1.msra.mxu0 0.0
  %1126 = vmatprep.subr.mxu0 0.0
  %1127 = vmatpush1.msra.mxu0 0.0
  %1128 = vmatprep.subr.mxu0 0.0
  %1129 = vmatpush1.msra.mxu0 0.0
  %1130 = vmatprep.subr.mxu0 0.0
  %1131 = vmatpush1.msra.mxu0 0.0
  %1132 = vmatprep.subr.mxu0 0.0
  %1133 = vmatpush1.msra.mxu0 0.0
  %1134 = vmatprep.subr.mxu0 0.0
  %1135 = vmatpush1.msra.mxu0 0.0
  %1136 = vmatprep.subr.mxu0 0.0
  %1137 = vmatpush1.msra.mxu0 0.0
  %1138 = vmatprep.subr.mxu0 0.0
  %1139 = vmatpush1.msra.mxu0 0.0
  %1140 = vmatprep.subr.mxu0 0.0
  %1141 = vmatpush1.msra.mxu0 0.0
  %1142 = vmatprep.subr.mxu0 0.0
  %1143 = vmatpush1.msra.mxu0 0.0
  %1144 = vmatprep.subr.mxu0 0.0
  %1145 = vmatpush1.msra.mxu0 0.0
  %1146 = vmatprep.subr.mxu0 0.0
  %1147 = vmatpush1.msra.mxu0 0.0
  %1148 = vmatprep.subr.mxu0 0.0
  %1149 = vmatpush1.msra.mxu0 0.0
  %1150 = vmatprep.subr.mxu0 0.0
  %1151 = vmatpush1.msra.mxu0 0.0
  %1152 = vmatprep.subr.mxu0 0.0
  %1153 = vmatpush1.msra.mxu0 0.0
  %1154 = vmatprep.subr.mxu0 0.0
  %1155 = vmatpush1.msra.mxu0 0.0
  %1156 = vmatprep.subr.mxu0 0.0
  %1157 = vmatpush1.msra.mxu0 0.0
  %1158 = vmatprep.subr.mxu0 0.0
  %1159 = vmatpush1.msra.mxu0 0.0
  %1160 = vmatprep.subr.mxu0 0.0
  %1161 = vmatpush1.msra.mxu0 0.0
  %1162 = vmatprep.subr.mxu0 0.0
  %1163 = vmatpush1.msra.mxu0 0.0
  %1164 = vmatprep.subr.mxu0 0.0
  %1165 = vmatpush1.msra.mxu0 0.0
  %1166 = vmatprep.mubr.f32.mxu0 0.0
  %1167 = vmatmul.mubr.f32.gmra.mrb[0].mxu0 %v1100
  %v1168 = vpop.f32.mrb[0].mxu0
  %v1169 = vadd.f32 0.0, %v1168
  %v1170 = vpop.f32.mrb[0].mxu0
  %1171 = vdwg.mxu0
  %vm1172 = vcmask 195584
  %v1174 = vsel %vm1172, %v1061, 0
  %1176 = vmatprep.subr.mxu0 0.0
  %1177 = vmatpush1.msra.mxu0 %v1062
  %1178 = vmatprep.subr.mxu0 0.0
  %1179 = vmatpush1.msra.mxu0 %v1063
  %1180 = vmatprep.subr.mxu0 0.0
  %1181 = vmatpush1.msra.mxu0 %v1064
  %1182 = vmatprep.subr.mxu0 0.0
  %1183 = vmatpush1.msra.mxu0 %v1065
  %1184 = vmatprep.subr.mxu0 0.0
  %1185 = vmatpush1.msra.mxu0 %v1066
  %1186 = vmatprep.subr.mxu0 0.0
  %1187 = vmatpush1.msra.mxu0 %v1067
  %1188 = vmatprep.subr.mxu0 0.0
  %1189 = vmatpush1.msra.mxu0 %v1068
  %1190 = vmatprep.subr.mxu0 0.0
  %1191 = vmatpush1.msra.mxu0 %v1069
  %1192 = vmatprep.subr.mxu0 0.0
  %1193 = vmatpush1.msra.mxu0 %v1070
  %1194 = vmatprep.subr.mxu0 0.0
  %1195 = vmatpush1.msra.mxu0 %v1071
  %1196 = vmatprep.subr.mxu0 0.0
  %1197 = vmatpush1.msra.mxu0 %v1072
  %1198 = vmatprep.subr.mxu0 0.0
  %1199 = vmatpush1.msra.mxu0 %v1073
  %1200 = vmatprep.subr.mxu0 0.0
  %1201 = vmatpush1.msra.mxu0 %v1074
  %1202 = vmatprep.subr.mxu0 0.0
  %1203 = vmatpush1.msra.mxu0 %v1075
  %1204 = vmatprep.subr.mxu0 0.0
  %1205 = vmatpush1.msra.mxu0 %v1076
  %1206 = vmatprep.subr.mxu0 0.0
  %1207 = vmatpush1.msra.mxu0 %v1077
  %1208 = vmatprep.subr.mxu0 0.0
  %1209 = vmatpush1.msra.mxu0 %v1078
  %1210 = vmatprep.subr.mxu0 0.0
  %1211 = vmatpush1.msra.mxu0 %v1079
  %1212 = vmatprep.subr.mxu0 0.0
  %1213 = vmatpush1.msra.mxu0 %v1080
  %1214 = vmatprep.subr.mxu0 0.0
  %1215 = vmatpush1.msra.mxu0 %v1081
  %1216 = vmatprep.subr.mxu0 0.0
  %1217 = vmatpush1.msra.mxu0 %v1082
  %1218 = vmatprep.subr.mxu0 0.0
  %1219 = vmatpush1.msra.mxu0 %v1083
  %1220 = vmatprep.subr.mxu0 0.0
  %1221 = vmatpush1.msra.mxu0 %v1084
  %1222 = vmatprep.subr.mxu0 0.0
  %1223 = vmatpush1.msra.mxu0 %v1085
  %1224 = vmatprep.subr.mxu0 0.0
  %1225 = vmatpush1.msra.mxu0 %v1086
  %1226 = vmatprep.subr.mxu0 0.0
  %1227 = vmatpush1.msra.mxu0 %v1087
  %1228 = vmatprep.subr.mxu0 0.0
  %1229 = vmatpush1.msra.mxu0 %v1088
  %1230 = vmatprep.subr.mxu0 0.0
  %1231 = vmatpush1.msra.mxu0 %v1089
  %1232 = vmatprep.subr.mxu0 0.0
  %1233 = vmatpush1.msra.mxu0 %v1090
  %1234 = vmatprep.subr.mxu0 0.0
  %1235 = vmatpush1.msra.mxu0 %v1091
  %1236 = vmatprep.subr.mxu0 0.0
  %1237 = vmatpush1.msra.mxu0 %v1092
  %1238 = vmatprep.subr.mxu0 0.0
  %1239 = vmatpush1.msra.mxu0 %v1093
  %1240 = vmatprep.mubr.f32.mxu0 %v1060
  %1241 = vmatmul.mubr.f32.gmra.mrb[0].mxu0 %v1059
  %v1242 = vpop.f32.mrb[0].mxu0
  %v1243 = vadd.f32 %v1169, %v1242
  %v1244 = vpop.f32.mrb[0].mxu0
  %1245 = vdwg.mxu0
  %1246 = vmatprep.subr.mxu0 0.0
  %1247 = vmatpush1.msra.mxu0 %v1094
  %1248 = vmatprep.subr.mxu0 0.0
  %1249 = vmatpush1.msra.mxu0 %v1095
  %1250 = vmatprep.subr.mxu0 0.0
  %1251 = vmatpush1.msra.mxu0 %v1096
  %1252 = vmatprep.subr.mxu0 0.0
  %1253 = vmatpush1.msra.mxu0 0.0
  %1254 = vmatprep.subr.mxu0 0.0
  %1255 = vmatpush1.msra.mxu0 0.0
  %1256 = vmatprep.subr.mxu0 0.0
  %1257 = vmatpush1.msra.mxu0 0.0
  %1258 = vmatprep.subr.mxu0 0.0
  %1259 = vmatpush1.msra.mxu0 0.0
  %1260 = vmatprep.subr.mxu0 0.0
  %1261 = vmatpush1.msra.mxu0 0.0
  %1262 = vmatprep.subr.mxu0 0.0
  %1263 = vmatpush1.msra.mxu0 0.0
  %1264 = vmatprep.subr.mxu0 0.0
  %1265 = vmatpush1.msra.mxu0 0.0
  %1266 = vmatprep.subr.mxu0 0.0
  %1267 = vmatpush1.msra.mxu0 0.0
  %1268 = vmatprep.subr.mxu0 0.0
  %1269 = vmatpush1.msra.mxu0 0.0
  %1270 = vmatprep.subr.mxu0 0.0
  %1271 = vmatpush1.msra.mxu0 0.0
  %1272 = vmatprep.subr.mxu0 0.0
  %1273 = vmatpush1.msra.mxu0 0.0
  %1274 = vmatprep.subr.mxu0 0.0
  %1275 = vmatpush1.msra.mxu0 0.0
  %1276 = vmatprep.subr.mxu0 0.0
  %1277 = vmatpush1.msra.mxu0 0.0
  %1278 = vmatprep.subr.mxu0 0.0
  %1279 = vmatpush1.msra.mxu0 0.0
  %1280 = vmatprep.subr.mxu0 0.0
  %1281 = vmatpush1.msra.mxu0 0.0
  %1282 = vmatprep.subr.mxu0 0.0
  %1283 = vmatpush1.msra.mxu0 0.0
  %1284 = vmatprep.subr.mxu0 0.0
  %1285 = vmatpush1.msra.mxu0 0.0
  %1286 = vmatprep.subr.mxu0 0.0
  %1287 = vmatpush1.msra.mxu0 0.0
  %1288 = vmatprep.subr.mxu0 0.0
  %1289 = vmatpush1.msra.mxu0 0.0
  %1290 = vmatprep.subr.mxu0 0.0
  %1291 = vmatpush1.msra.mxu0 0.0
  %1292 = vmatprep.subr.mxu0 0.0
  %1293 = vmatpush1.msra.mxu0 0.0
  %1294 = vmatprep.subr.mxu0 0.0
  %1295 = vmatpush1.msra.mxu0 0.0
  %1296 = vmatprep.subr.mxu0 0.0
  %1297 = vmatpush1.msra.mxu0 0.0
  %1298 = vmatprep.subr.mxu0 0.0
  %1299 = vmatpush1.msra.mxu0 0.0
  %1300 = vmatprep.subr.mxu0 0.0
  %1301 = vmatpush1.msra.mxu0 0.0
  %1302 = vmatprep.subr.mxu0 0.0
  %1303 = vmatpush1.msra.mxu0 0.0
  %1304 = vmatprep.subr.mxu0 0.0
  %1305 = vmatpush1.msra.mxu0 0.0
  %1306 = vmatprep.subr.mxu0 0.0
  %1307 = vmatpush1.msra.mxu0 0.0
  %1308 = vmatprep.subr.mxu0 0.0
  %1309 = vmatpush1.msra.mxu0 0.0
  %1310 = vmatprep.mubr.f32.mxu0 0.0
  %1311 = vmatmul.mubr.f32.gmra.mrb[0].mxu0 %v1174
  %v1312 = vpop.f32.mrb[0].mxu0
  %v1313 = vadd.f32 %v1243, %v1312
  %v1314 = vpop.f32.mrb[0].mxu0
  %1315 = vdwg.mxu0
  %v1316 = vld [vmem:[%s9] sm:$0x1]
  %v1318 = vlaneseq
  %v1319 = vshrl.u32 %v1318, 7
  %v1320 = vsub.s32 0, %v1319
  %v1321 = vrot.slane %v1316, %v1320
  %v1323 = vadd.f32 %v1313, %v1321
  %v1324 = vmax.f32 %v1323, 0.0
  %v1325 = vld [vmem:[%s2] sm:$0x3]
  %v1326 = vld [vmem:[%s10] sm:$0xff]
  %v1327 = vld [vmem:[%s11] sm:$0x1]
  %v1329 = vlaneseq
  %v1330 = vshrl.u32 %v1329, 7
  %v1331 = vsub.s32 0, %v1330
  %v1332 = vrot.slane %v1327, %v1331
  %v1335 = vsel %vm773, %v1325, 0
  %1337 = vmatprep.subr.mxu0 0.0
  %1338 = vmatpush1.msra.mxu0 %v1326
  %1339 = vmatprep.subr.mxu0 0.0
  %1340 = vmatpush1.msra.mxu0 0.0
  %1341 = vmatprep.subr.mxu0 0.0
  %1342 = vmatpush1.msra.mxu0 0.0
  %1343 = vmatprep.subr.mxu0 0.0
  %1344 = vmatpush1.msra.mxu0 0.0
  %1345 = vmatprep.subr.mxu0 0.0
  %1346 = vmatpush1.msra.mxu0 0.0
  %1347 = vmatprep.subr.mxu0 0.0
  %1348 = vmatpush1.msra.mxu0 0.0
  %1349 = vmatprep.subr.mxu0 0.0
  %1350 = vmatpush1.msra.mxu0 0.0
  %1351 = vmatprep.subr.mxu0 0.0
  %1352 = vmatpush1.msra.mxu0 0.0
  %1353 = vmatprep.subr.mxu0 0.0
  %1354 = vmatpush1.msra.mxu0 0.0
  %1355 = vmatprep.subr.mxu0 0.0
  %1356 = vmatpush1.msra.mxu0 0.0
  %1357 = vmatprep.subr.mxu0 0.0
  %1358 = vmatpush1.msra.mxu0 0.0
  %1359 = vmatprep.subr.mxu0 0.0
  %1360 = vmatpush1.msra.mxu0 0.0
  %1361 = vmatprep.subr.mxu0 0.0
  %1362 = vmatpush1.msra.mxu0 0.0
  %1363 = vmatprep.subr.mxu0 0.0
  %1364 = vmatpush1.msra.mxu0 0.0
  %1365 = vmatprep.subr.mxu0 0.0
  %1366 = vmatpush1.msra.mxu0 0.0
  %1367 = vmatprep.subr.mxu0 0.0
  %1368 = vmatpush1.msra.mxu0 0.0
  %1369 = vmatprep.subr.mxu0 0.0
  %1370 = vmatpush1.msra.mxu0 0.0
  %1371 = vmatprep.subr.mxu0 0.0
  %1372 = vmatpush1.msra.mxu0 0.0
  %1373 = vmatprep.subr.mxu0 0.0
  %1374 = vmatpush1.msra.mxu0 0.0
  %1375 = vmatprep.subr.mxu0 0.0
  %1376 = vmatpush1.msra.mxu0 0.0
  %1377 = vmatprep.subr.mxu0 0.0
  %1378 = vmatpush1.msra.mxu0 0.0
  %1379 = vmatprep.subr.mxu0 0.0
  %1380 = vmatpush1.msra.mxu0 0.0
  %1381 = vmatprep.subr.mxu0 0.0
  %1382 = vmatpush1.msra.mxu0 0.0
  %1383 = vmatprep.subr.mxu0 0.0
  %1384 = vmatpush1.msra.mxu0 0.0
  %1385 = vmatprep.subr.mxu0 0.0
  %1386 = vmatpush1.msra.mxu0 0.0
  %1387 = vmatprep.subr.mxu0 0.0
  %1388 = vmatpush1.msra.mxu0 0.0
  %1389 = vmatprep.subr.mxu0 0.0
  %1390 = vmatpush1.msra.mxu0 0.0
  %1391 = vmatprep.subr.mxu0 0.0
  %1392 = vmatpush1.msra.mxu0 0.0
  %1393 = vmatprep.subr.mxu0 0.0
  %1394 = vmatpush1.msra.mxu0 0.0
  %1395 = vmatprep.subr.mxu0 0.0
  %1396 = vmatpush1.msra.mxu0 0.0
  %1397 = vmatprep.subr.mxu0 0.0
  %1398 = vmatpush1.msra.mxu0 0.0
  %1399 = vmatprep.subr.mxu0 0.0
  %1400 = vmatpush1.msra.mxu0 0.0
  %1401 = vmatprep.mubr.f32.mxu0 0.0
  %1402 = vmatmul.mubr.f32.gmra.mrb[0].mxu0 %v1335
  %v1403 = vpop.f32.mrb[0].mxu0
  %v1404 = vadd.f32 %v1332, %v1403
  %v1405 = vpop.f32.mrb[0].mxu0
  %1406 = vdwg.mxu0
  %v1407 = vmax.f32 %v1404, 0.0
  %v1408 = vld [vmem:[%s12] sm:$0xff]
  %v1409 = vld [vmem:[%s12 + $0x8] sm:$0x3f]
  %v1410 = vld [vmem:[%s13] sm:$0xff]
  %v1411 = vld [vmem:[%s13 + $0x8] sm:$0xff]
  %vm1412 = vcmask 130048
  %v1414 = vsel %vm1412, %v1407, 0
  %1416 = vmatprep.subr.mxu0 0.0
  %1417 = vmatpush1.msra.mxu0 %v1410
  %1418 = vmatprep.subr.mxu0 0.0
  %1419 = vmatpush1.msra.mxu0 %v1411
  %1420 = vmatprep.subr.mxu0 0.0
  %1421 = vmatpush1.msra.mxu0 0.0
  %1422 = vmatprep.subr.mxu0 0.0
  %1423 = vmatpush1.msra.mxu0 0.0
  %1424 = vmatprep.subr.mxu0 0.0
  %1425 = vmatpush1.msra.mxu0 0.0
  %1426 = vmatprep.subr.mxu0 0.0
  %1427 = vmatpush1.msra.mxu0 0.0
  %1428 = vmatprep.subr.mxu0 0.0
  %1429 = vmatpush1.msra.mxu0 0.0
  %1430 = vmatprep.subr.mxu0 0.0
  %1431 = vmatpush1.msra.mxu0 0.0
  %1432 = vmatprep.subr.mxu0 0.0
  %1433 = vmatpush1.msra.mxu0 0.0
  %1434 = vmatprep.subr.mxu0 0.0
  %1435 = vmatpush1.msra.mxu0 0.0
  %1436 = vmatprep.subr.mxu0 0.0
  %1437 = vmatpush1.msra.mxu0 0.0
  %1438 = vmatprep.subr.mxu0 0.0
  %1439 = vmatpush1.msra.mxu0 0.0
  %1440 = vmatprep.subr.mxu0 0.0
  %1441 = vmatpush1.msra.mxu0 0.0
  %1442 = vmatprep.subr.mxu0 0.0
  %1443 = vmatpush1.msra.mxu0 0.0
  %1444 = vmatprep.subr.mxu0 0.0
  %1445 = vmatpush1.msra.mxu0 0.0
  %1446 = vmatprep.subr.mxu0 0.0
  %1447 = vmatpush1.msra.mxu0 0.0
  %1448 = vmatprep.subr.mxu0 0.0
  %1449 = vmatpush1.msra.mxu0 0.0
  %1450 = vmatprep.subr.mxu0 0.0
  %1451 = vmatpush1.msra.mxu0 0.0
  %1452 = vmatprep.subr.mxu0 0.0
  %1453 = vmatpush1.msra.mxu0 0.0
  %1454 = vmatprep.subr.mxu0 0.0
  %1455 = vmatpush1.msra.mxu0 0.0
  %1456 = vmatprep.subr.mxu0 0.0
  %1457 = vmatpush1.msra.mxu0 0.0
  %1458 = vmatprep.subr.mxu0 0.0
  %1459 = vmatpush1.msra.mxu0 0.0
  %1460 = vmatprep.subr.mxu0 0.0
  %1461 = vmatpush1.msra.mxu0 0.0
  %1462 = vmatprep.subr.mxu0 0.0
  %1463 = vmatpush1.msra.mxu0 0.0
  %1464 = vmatprep.subr.mxu0 0.0
  %1465 = vmatpush1.msra.mxu0 0.0
  %1466 = vmatprep.subr.mxu0 0.0
  %1467 = vmatpush1.msra.mxu0 0.0
  %1468 = vmatprep.subr.mxu0 0.0
  %1469 = vmatpush1.msra.mxu0 0.0
  %1470 = vmatprep.subr.mxu0 0.0
  %1471 = vmatpush1.msra.mxu0 0.0
  %1472 = vmatprep.subr.mxu0 0.0
  %1473 = vmatpush1.msra.mxu0 0.0
  %1474 = vmatprep.subr.mxu0 0.0
  %1475 = vmatpush1.msra.mxu0 0.0
  %1476 = vmatprep.subr.mxu0 0.0
  %1477 = vmatpush1.msra.mxu0 0.0
  %1478 = vmatprep.subr.mxu0 0.0
  %1479 = vmatpush1.msra.mxu0 0.0
  %1480 = vmatprep.mubr.f32.mxu0 0.0
  %1481 = vmatmul.mubr.f32.gmra.mrb[0].mxu0 %v1414
  %v1482 = vpop.f32.mrb[0].mxu0
  %v1483 = vadd.f32 0.0, %v1482
  %v1484 = vpop.f32.mrb[0].mxu0
  %1485 = vdwg.mxu0
  %vm1486 = vcmask 113664
  %v1488 = vsel %vm1486, %v1324, 0
  %vm1490 = vcmask 1045504
  %v1492 = vsel %vm1490, %v1409, 0
  %1494 = vmatprep.subr.mxu0 0.0
  %1495 = vmatpush1.msra.mxu0 %v1408
  %1496 = vmatprep.subr.mxu0 0.0
  %1497 = vmatpush1.msra.mxu0 %v1492
  %1498 = vmatprep.subr.mxu0 0.0
  %1499 = vmatpush1.msra.mxu0 0.0
  %1500 = vmatprep.subr.mxu0 0.0
  %1501 = vmatpush1.msra.mxu0 0.0
  %1502 = vmatprep.subr.mxu0 0.0
  %1503 = vmatpush1.msra.mxu0 0.0
  %1504 = vmatprep.subr.mxu0 0.0
  %1505 = vmatpush1.msra.mxu0 0.0
  %1506 = vmatprep.subr.mxu0 0.0
  %1507 = vmatpush1.msra.mxu0 0.0
  %1508 = vmatprep.subr.mxu0 0.0
  %1509 = vmatpush1.msra.mxu0 0.0
  %1510 = vmatprep.subr.mxu0 0.0
  %1511 = vmatpush1.msra.mxu0 0.0
  %1512 = vmatprep.subr.mxu0 0.0
  %1513 = vmatpush1.msra.mxu0 0.0
  %1514 = vmatprep.subr.mxu0 0.0
  %1515 = vmatpush1.msra.mxu0 0.0
  %1516 = vmatprep.subr.mxu0 0.0
  %1517 = vmatpush1.msra.mxu0 0.0
  %1518 = vmatprep.subr.mxu0 0.0
  %1519 = vmatpush1.msra.mxu0 0.0
  %1520 = vmatprep.subr.mxu0 0.0
  %1521 = vmatpush1.msra.mxu0 0.0
  %1522 = vmatprep.subr.mxu0 0.0
  %1523 = vmatpush1.msra.mxu0 0.0
  %1524 = vmatprep.subr.mxu0 0.0
  %1525 = vmatpush1.msra.mxu0 0.0
  %1526 = vmatprep.subr.mxu0 0.0
  %1527 = vmatpush1.msra.mxu0 0.0
  %1528 = vmatprep.subr.mxu0 0.0
  %1529 = vmatpush1.msra.mxu0 0.0
  %1530 = vmatprep.subr.mxu0 0.0
  %1531 = vmatpush1.msra.mxu0 0.0
  %1532 = vmatprep.subr.mxu0 0.0
  %1533 = vmatpush1.msra.mxu0 0.0
  %1534 = vmatprep.subr.mxu0 0.0
  %1535 = vmatpush1.msra.mxu0 0.0
  %1536 = vmatprep.subr.mxu0 0.0
  %1537 = vmatpush1.msra.mxu0 0.0
  %1538 = vmatprep.subr.mxu0 0.0
  %1539 = vmatpush1.msra.mxu0 0.0
  %1540 = vmatprep.subr.mxu0 0.0
  %1541 = vmatpush1.msra.mxu0 0.0
  %1542 = vmatprep.subr.mxu0 0.0
  %1543 = vmatpush1.msra.mxu0 0.0
  %1544 = vmatprep.subr.mxu0 0.0
  %1545 = vmatpush1.msra.mxu0 0.0
  %1546 = vmatprep.subr.mxu0 0.0
  %1547 = vmatpush1.msra.mxu0 0.0
  %1548 = vmatprep.subr.mxu0 0.0
  %1549 = vmatpush1.msra.mxu0 0.0
  %1550 = vmatprep.subr.mxu0 0.0
  %1551 = vmatpush1.msra.mxu0 0.0
  %1552 = vmatprep.subr.mxu0 0.0
  %1553 = vmatpush1.msra.mxu0 0.0
  %1554 = vmatprep.subr.mxu0 0.0
  %1555 = vmatpush1.msra.mxu0 0.0
  %1556 = vmatprep.subr.mxu0 0.0
  %1557 = vmatpush1.msra.mxu0 0.0
  %1558 = vmatprep.mubr.f32.mxu0 0.0
  %1559 = vmatmul.mubr.f32.gmra.mrb[0].mxu0 %v1488
  %v1560 = vpop.f32.mrb[0].mxu0
  %v1561 = vadd.f32 %v1483, %v1560
  %v1562 = vpop.f32.mrb[0].mxu0
  %1563 = vdwg.mxu0
  %v1564 = vld [vmem:[%s14] sm:$0x1]
  %v1566 = vlaneseq
  %v1567 = vshrl.u32 %v1566, 7
  %v1568 = vsub.s32 0, %v1567
  %v1569 = vrot.slane %v1564, %v1568
  %v1571 = vadd.f32 %v1561, %v1569
  %vm1572 = vcmask 9216
  %1573 = vst.msk [vmem:[%s15] sm:$0x3] %vm1572, %v1571
  // Predicated region
  $region62: #{double_critic_pallas.1} parent=0 // pred_check
    _
  $region63: #{double_critic_pallas.1} parent=0 // pred_check_branch
    %1575 = sbr.rel (0) target = $region65
  $region64: #{double_critic_pallas.1} parent=0 // pred_region
    _
  $region65: #{double_critic_pallas.1} parent=0 // pred_fallthru
    _
  // Predicated region
  $region66: #{double_critic_pallas.1} parent=0 // pred_check
    _
  $region67: #{double_critic_pallas.1} parent=0 // pred_check_branch
    %1577 = sbr.rel (0) target = $region69
  $region68: #{double_critic_pallas.1} parent=0 // pred_region
    _
  $region69: #{double_critic_pallas.1} parent=0 // pred_fallthru
    _

</llo_original>
